<compile_context>
chip_gen: v6e
topology: v6e:2x2x1
jax: 0.10.0
libtpu: 0.0.40
codegen_flags: <defaults>
</compile_context>

<pallas_src>
import jax
import jax.numpy as jnp
from jax.experimental import pallas as pl
from jax.experimental.pallas import tpu as pltpu

# ---- module hyper-parameters (consistent with the PyTorch forward) ----------
INPUT_DIM = 40
NUM_FEATURES = 2                       # 20 * num_features must equal 40
FC_HIDDEN = (32, 16)
CONV_CHANNELS = (4, 2)                 # last conv maps to 1 channel -> 20 values
POSITIONS = INPUT_DIM // NUM_FEATURES  # 20 spatial positions for the 1x1 convs
DROPOUT_STRENGTH = 0.1                 # inference: identity
OUT_PAD = 128                          # lane-dense padded logit width


def _round_up(a, b):
    return (a + b - 1) // b * b


# ------------------------------ Pallas kernel --------------------------------
def network_kernel(x_ref,
                   wf1_ref, bf1_ref, wf2_ref, bf2_ref, wf3_ref, bf3_ref,
                   wc1_ref, bc1_ref, wc2_ref, bc2_ref,
                   wfin_ref, bfin_ref,
                   out_ref):
    def dense(h, w_ref, b_ref, relu=True):
        y = jnp.dot(h, w_ref[...], preferred_element_type=jnp.float32) + b_ref[...]
        return jnp.maximum(y, 0.0) if relu else y

    # bf16-streamed input, upcast once; all accumulation in f32.
    x = x_ref[...].astype(jnp.float32)                  # (tb, 40)

    # fc_layers (Dropout is identity at inference)
    h = dense(x, wf1_ref, bf1_ref)                      # (tb, 32)
    h = dense(h, wf2_ref, bf2_ref)                      # (tb, 16)
    h = dense(h, wf3_ref, bf3_ref)                      # (tb, 40)

    # first two 1x1 convs as block-diagonal matmuls (+ReLU)
    h = dense(h, wc1_ref, bc1_ref)                      # (tb, 20*4)
    h = dense(h, wc2_ref, bc2_ref)                      # (tb, 20*2)

    # last conv (no ReLU) fused with fc_4; weight padded to 128 lanes, padded
    # columns carry a -1e30 bias so softmax ignores them exactly.
    logits = dense(h, wfin_ref, bfin_ref, relu=False)   # (tb, 128)

    m = jnp.max(logits, axis=-1, keepdims=True)
    e = jnp.exp(logits - m)
    probs = e / jnp.sum(e, axis=-1, keepdims=True)      # (tb, 128)

    # Lane-dense store: full-tile transpose (tb,128)->(128,tb), keep 2 rows.
    out_ref[...] = probs.T[:2, :]                       # (2, tb)


# ------------------------------ wrapper / glue --------------------------------
def expand_conv_1x1(w, b, positions):
    """Turn a 1x1 conv (out_c, in_c, 1, 1) acting on `positions` spatial slots
    into an equivalent dense matmul weight of shape (P*in_c, P*out_c)."""
    w2d = w[:, :, 0, 0]                                          # (out_c, in_c)
    w_exp = jnp.kron(jnp.eye(positions, dtype=w.dtype), w2d.T)   # (P*in, P*out)
    b_exp = jnp.tile(b, positions)                               # (P*out,)
    return w_exp, b_exp


def network_forward(x, params, *, batch_tile=512, input_dtype=jnp.bfloat16):
    """x: (N, 20, NUM_FEATURES) -> (N, 2) softmax probabilities."""
    N = x.shape[0]
    # == x.view(-1, 40); cast to bf16 for HBM streaming (ideally the caller
    # already provides bf16 so this cast fuses upstream).
    x2d = x.reshape(N, POSITIONS * NUM_FEATURES)
    if x2d.dtype != input_dtype:
        x2d = x2d.astype(input_dtype)

    # Batch tile: multiple of 128 (lane-dense transposed output), capped by the
    # (rounded-up) batch so small batches don't over-pad.
    tb = min(_round_up(max(batch_tile, 1), 128), _round_up(N, 128))
    n_pad = _round_up(N, tb)
    if n_pad != N:
        x2d = jnp.pad(x2d, ((0, n_pad - N), (0, 0)))

    (wf1, bf1), (wf2, bf2), (wf3, bf3) = params["fc"]
    (cw1, cb1), (cw2, cb2), (cw3, cb3) = params["conv"]
    wf4, bf4 = params["fc4"]

    wc1, bc1 = expand_conv_1x1(cw1, cb1, POSITIONS)              # (40,80),(80,)
    wc2, bc2 = expand_conv_1x1(cw2, cb2, POSITIONS)              # (80,40),(40,)
    wc3, bc3 = expand_conv_1x1(cw3, cb3, POSITIONS)              # (40,20),(20,)

    # Exact fusion of the last conv (no ReLU) with fc_4: Linear(20, 2).
    w_fused = wc3 @ wf4.T                                        # (40, 2)
    b_fused = bc3 @ wf4.T + bf4                                  # (2,)
    w_pad = jnp.zeros((INPUT_DIM, OUT_PAD), jnp.float32).at[:, :2].set(w_fused)
    b_pad = jnp.full((OUT_PAD,), -1e30, jnp.float32).at[:2].set(b_fused)

    kernel_params = [
        wf1.T, bf1.reshape(1, -1),
        wf2.T, bf2.reshape(1, -1),
        wf3.T, bf3.reshape(1, -1),
        wc1, bc1.reshape(1, -1),
        wc2, bc2.reshape(1, -1),
        w_pad, b_pad.reshape(1, -1),
    ]

    grid = (n_pad // tb,)
    x_spec = pl.BlockSpec((tb, INPUT_DIM), lambda i: (i, 0))
    # Weights/biases: full-array blocks with a constant index_map -> fetched once.
    param_specs = [pl.BlockSpec(p.shape, lambda i: (0, 0)) for p in kernel_params]
    out_spec = pl.BlockSpec((2, tb), lambda i: (0, i))           # lane-dense

    out_t = pl.pallas_call(
        network_kernel,
        out_shape=jax.ShapeDtypeStruct((2, n_pad), jnp.float32),
        grid_spec=pltpu.PrefetchScalarGridSpec(
            num_scalar_prefetch=0,
            grid=grid,
            in_specs=[x_spec] + param_specs,
            out_specs=out_spec,
        ),
        compiler_params=pltpu.CompilerParams(
            dimension_semantics=("parallel",),        # megacore sharding on v7x
            vmem_limit_bytes=48 * 1024 * 1024,        # fits v7x 64 MiB; > v5e 16 MiB default
        ),
    )(x2d, *kernel_params)

    return out_t.T[:N]                                           # (N, 2)


# ------------------------- deterministic parameter init -----------------------
def init_linear(key, out_dim, in_dim):
    k1, k2 = jax.random.split(key)
    bound = 1.0 / jnp.sqrt(jnp.float32(in_dim))
    w = jax.random.uniform(k1, (out_dim, in_dim), jnp.float32, -bound, bound)
    b = jax.random.uniform(k2, (out_dim,), jnp.float32, -bound, bound)
    return w, b


def init_conv1x1(key, out_c, in_c):
    k1, k2 = jax.random.split(key)
    bound = 1.0 / jnp.sqrt(jnp.float32(in_c))
    w = jax.random.uniform(k1, (out_c, in_c, 1, 1), jnp.float32, -bound, bound)
    b = jax.random.uniform(k2, (out_c,), jnp.float32, -bound, bound)
    return w, b


def init_params(key):
    keys = jax.random.split(key, 8)
    fc = []
    in_dim = INPUT_DIM
    for i, hu in enumerate(FC_HIDDEN):
        fc.append(init_linear(keys[i], hu, in_dim))
        in_dim = hu
    fc.append(init_linear(keys[2], INPUT_DIM, in_dim))

    conv = []
    in_c = NUM_FEATURES
    for i, c in enumerate(CONV_CHANNELS):
        conv.append(init_conv1x1(keys[3 + i], c, in_c))
        in_c = c
    conv.append(init_conv1x1(keys[5], 1, in_c))

    fc4 = init_linear(keys[6], 2, INPUT_DIM // in_c)             # Linear(20, 2)
    return {"fc": fc, "conv": conv, "fc4": fc4}


# ---------------------------- pure-JAX reference -------------------------------
def reference_forward(x, params):
    N = x.shape[0]
    h = x.reshape(-1, POSITIONS * NUM_FEATURES)
    for w, b in params["fc"]:
        h = jnp.maximum(h @ w.T + b, 0.0)                        # Dropout == identity
    z = h.reshape(-1, POSITIONS, 1, NUM_FEATURES)
    z = jnp.transpose(z, (0, 3, 2, 1))                           # NCHW (N, F, 1, 20)
    convs = params["conv"]
    for idx, (w, b) in enumerate(convs):
        z = jnp.einsum("nchw,oc->nohw", z, w[:, :, 0, 0]) + b[None, :, None, None]
        if idx < len(convs) - 1:
            z = jnp.maximum(z, 0.0)
    flat = z.reshape(N, -1)                                      # (N, 20)
    w4, b4 = params["fc4"]
    logits = flat @ w4.T + b4
    return jax.nn.softmax(logits, axis=1)


# ------------------------------------ main -------------------------------------
if __name__ == "__main__":
    key = jax.random.PRNGKey(0)
    k_param, k_x = jax.random.split(key)
    params = init_params(k_param)

    N = 8
    x = jax.random.normal(k_x, (N, POSITIONS, NUM_FEATURES), jnp.float32)

    fwd = jax.jit(lambda xx: network_forward(xx, params))
    out = jax.block_until_ready(fwd(x))
    assert out.shape == (N, 2)

    # Tight check: reference fed the same bf16-quantized input (only remaining
    # delta is matmul accumulation order).
    x_q = x.astype(jnp.bfloat16).astype(jnp.float32)
    ref_q = reference_forward(x_q, params)
    assert jnp.allclose(out, ref_q, atol=1e-4, rtol=1e-4), (out, ref_q)

    # Loose check against the full-f32 module semantics (bf16 input streaming
    # is the only approximation).
    ref = reference_forward(x, params)
    assert jnp.allclose(out, ref, atol=5e-2), (out, ref)
    assert jnp.allclose(jnp.sum(out, axis=1), 1.0, atol=1e-5)

    print("KERNEL_OK")
</pallas_src>

<mosaic_0001>
module attributes {stable_mosaic.version = 11 : i64} {
  func.func @network_kernel(%arg0: i32, %arg1: memref<128x40xbf16, #tpu.memory_space<vmem>>, %arg2: memref<40x32xf32, #tpu.memory_space<vmem>>, %arg3: memref<1x32xf32, #tpu.memory_space<vmem>>, %arg4: memref<32x16xf32, #tpu.memory_space<vmem>>, %arg5: memref<1x16xf32, #tpu.memory_space<vmem>>, %arg6: memref<16x40xf32, #tpu.memory_space<vmem>>, %arg7: memref<1x40xf32, #tpu.memory_space<vmem>>, %arg8: memref<40x80xf32, #tpu.memory_space<vmem>>, %arg9: memref<1x80xf32, #tpu.memory_space<vmem>>, %arg10: memref<80x40xf32, #tpu.memory_space<vmem>>, %arg11: memref<1x40xf32, #tpu.memory_space<vmem>>, %arg12: memref<40x128xf32, #tpu.memory_space<vmem>>, %arg13: memref<1x128xf32, #tpu.memory_space<vmem>>, %arg14: memref<2x128xf32, #tpu.memory_space<vmem>>) attributes {dimension_semantics = [#tpu.dimension_semantics<parallel>], iteration_bounds = array<i64: 1>, scalar_prefetch = 0 : i64, scratch_operands = 0 : i64, tpu.core_type = #tpu.core_type<tc>, window_params = [{transform_indices = @transform_0, window_bounds = array<i64: 128, 40>}, {pipeline_mode = #tpu.pipeline_mode<synchronous>, transform_indices = @transform_1, window_bounds = array<i64: 40, 32>}, {pipeline_mode = #tpu.pipeline_mode<synchronous>, transform_indices = @transform_2, window_bounds = array<i64: 1, 32>}, {pipeline_mode = #tpu.pipeline_mode<synchronous>, transform_indices = @transform_3, window_bounds = array<i64: 32, 16>}, {pipeline_mode = #tpu.pipeline_mode<synchronous>, transform_indices = @transform_4, window_bounds = array<i64: 1, 16>}, {pipeline_mode = #tpu.pipeline_mode<synchronous>, transform_indices = @transform_5, window_bounds = array<i64: 16, 40>}, {pipeline_mode = #tpu.pipeline_mode<synchronous>, transform_indices = @transform_6, window_bounds = array<i64: 1, 40>}, {pipeline_mode = #tpu.pipeline_mode<synchronous>, transform_indices = @transform_7, window_bounds = array<i64: 40, 80>}, {pipeline_mode = #tpu.pipeline_mode<synchronous>, transform_indices = @transform_8, window_bounds = array<i64: 1, 80>}, {pipeline_mode = #tpu.pipeline_mode<synchronous>, transform_indices = @transform_9, window_bounds = array<i64: 80, 40>}, {pipeline_mode = #tpu.pipeline_mode<synchronous>, transform_indices = @transform_10, window_bounds = array<i64: 1, 40>}, {pipeline_mode = #tpu.pipeline_mode<synchronous>, transform_indices = @transform_11, window_bounds = array<i64: 40, 128>}, {pipeline_mode = #tpu.pipeline_mode<synchronous>, transform_indices = @transform_12, window_bounds = array<i64: 1, 128>}, {transform_indices = @transform_13, window_bounds = array<i64: 2, 128>}]} {
    %c0 = arith.constant 0 : index
    %c0_0 = arith.constant 0 : index
    %0 = vector.load %arg1[%c0, %c0_0] : memref<128x40xbf16, #tpu.memory_space<vmem>>, vector<128x40xbf16>
    %1 = arith.extf %0 : vector<128x40xbf16> to vector<128x40xf32>
    %c0_1 = arith.constant 0 : index
    %c0_2 = arith.constant 0 : index
    %2 = vector.load %arg2[%c0_1, %c0_2] : memref<40x32xf32, #tpu.memory_space<vmem>>, vector<40x32xf32>
    %cst = arith.constant dense<0.000000e+00> : vector<128x32xf32>
    %3 = tpu.matmul %1, %2, %cst {dimension_numbers = #tpu.dot_dimension_numbers<[1], [0], [0], [1], [0, 0, 1, 1], [], []>} : vector<128x40xf32>, vector<40x32xf32>, vector<128x32xf32> -> vector<128x32xf32>
    %c0_3 = arith.constant 0 : index
    %c0_4 = arith.constant 0 : index
    %4 = vector.load %arg3[%c0_3, %c0_4] : memref<1x32xf32, #tpu.memory_space<vmem>>, vector<1x32xf32>
    %5 = vector.broadcast %4 : vector<1x32xf32> to vector<128x32xf32>
    %6 = arith.addf %3, %5 : vector<128x32xf32>
    %cst_5 = arith.constant 0.000000e+00 : f32
    %7 = vector.broadcast %cst_5 : f32 to vector<128x32xf32>
    %8 = arith.maximumf %6, %7 : vector<128x32xf32>
    %c0_6 = arith.constant 0 : index
    %c0_7 = arith.constant 0 : index
    %9 = vector.load %arg4[%c0_6, %c0_7] : memref<32x16xf32, #tpu.memory_space<vmem>>, vector<32x16xf32>
    %cst_8 = arith.constant dense<0.000000e+00> : vector<128x16xf32>
    %10 = tpu.matmul %8, %9, %cst_8 {dimension_numbers = #tpu.dot_dimension_numbers<[1], [0], [0], [1], [0, 0, 1, 1], [], []>} : vector<128x32xf32>, vector<32x16xf32>, vector<128x16xf32> -> vector<128x16xf32>
    %c0_9 = arith.constant 0 : index
    %c0_10 = arith.constant 0 : index
    %11 = vector.load %arg5[%c0_9, %c0_10] : memref<1x16xf32, #tpu.memory_space<vmem>>, vector<1x16xf32>
    %12 = vector.broadcast %11 : vector<1x16xf32> to vector<128x16xf32>
    %13 = arith.addf %10, %12 : vector<128x16xf32>
    %cst_11 = arith.constant 0.000000e+00 : f32
    %14 = vector.broadcast %cst_11 : f32 to vector<128x16xf32>
    %15 = arith.maximumf %13, %14 : vector<128x16xf32>
    %c0_12 = arith.constant 0 : index
    %c0_13 = arith.constant 0 : index
    %16 = vector.load %arg6[%c0_12, %c0_13] : memref<16x40xf32, #tpu.memory_space<vmem>>, vector<16x40xf32>
    %cst_14 = arith.constant dense<0.000000e+00> : vector<128x40xf32>
    %17 = tpu.matmul %15, %16, %cst_14 {dimension_numbers = #tpu.dot_dimension_numbers<[1], [0], [0], [1], [0, 0, 1, 1], [], []>} : vector<128x16xf32>, vector<16x40xf32>, vector<128x40xf32> -> vector<128x40xf32>
    %c0_15 = arith.constant 0 : index
    %c0_16 = arith.constant 0 : index
    %18 = vector.load %arg7[%c0_15, %c0_16] : memref<1x40xf32, #tpu.memory_space<vmem>>, vector<1x40xf32>
    %19 = vector.broadcast %18 : vector<1x40xf32> to vector<128x40xf32>
    %20 = arith.addf %17, %19 : vector<128x40xf32>
    %cst_17 = arith.constant 0.000000e+00 : f32
    %21 = vector.broadcast %cst_17 : f32 to vector<128x40xf32>
    %22 = arith.maximumf %20, %21 : vector<128x40xf32>
    %c0_18 = arith.constant 0 : index
    %c0_19 = arith.constant 0 : index
    %23 = vector.load %arg8[%c0_18, %c0_19] : memref<40x80xf32, #tpu.memory_space<vmem>>, vector<40x80xf32>
    %cst_20 = arith.constant dense<0.000000e+00> : vector<128x80xf32>
    %24 = tpu.matmul %22, %23, %cst_20 {dimension_numbers = #tpu.dot_dimension_numbers<[1], [0], [0], [1], [0, 0, 1, 1], [], []>} : vector<128x40xf32>, vector<40x80xf32>, vector<128x80xf32> -> vector<128x80xf32>
    %c0_21 = arith.constant 0 : index
    %c0_22 = arith.constant 0 : index
    %25 = vector.load %arg9[%c0_21, %c0_22] : memref<1x80xf32, #tpu.memory_space<vmem>>, vector<1x80xf32>
    %26 = vector.broadcast %25 : vector<1x80xf32> to vector<128x80xf32>
    %27 = arith.addf %24, %26 : vector<128x80xf32>
    %cst_23 = arith.constant 0.000000e+00 : f32
    %28 = vector.broadcast %cst_23 : f32 to vector<128x80xf32>
    %29 = arith.maximumf %27, %28 : vector<128x80xf32>
    %c0_24 = arith.constant 0 : index
    %c0_25 = arith.constant 0 : index
    %30 = vector.load %arg10[%c0_24, %c0_25] : memref<80x40xf32, #tpu.memory_space<vmem>>, vector<80x40xf32>
    %cst_26 = arith.constant dense<0.000000e+00> : vector<128x40xf32>
    %31 = tpu.matmul %29, %30, %cst_26 {dimension_numbers = #tpu.dot_dimension_numbers<[1], [0], [0], [1], [0, 0, 1, 1], [], []>} : vector<128x80xf32>, vector<80x40xf32>, vector<128x40xf32> -> vector<128x40xf32>
    %c0_27 = arith.constant 0 : index
    %c0_28 = arith.constant 0 : index
    %32 = vector.load %arg11[%c0_27, %c0_28] : memref<1x40xf32, #tpu.memory_space<vmem>>, vector<1x40xf32>
    %33 = vector.broadcast %32 : vector<1x40xf32> to vector<128x40xf32>
    %34 = arith.addf %31, %33 : vector<128x40xf32>
    %cst_29 = arith.constant 0.000000e+00 : f32
    %35 = vector.broadcast %cst_29 : f32 to vector<128x40xf32>
    %36 = arith.maximumf %34, %35 : vector<128x40xf32>
    %c0_30 = arith.constant 0 : index
    %c0_31 = arith.constant 0 : index
    %37 = vector.load %arg12[%c0_30, %c0_31] : memref<40x128xf32, #tpu.memory_space<vmem>>, vector<40x128xf32>
    %cst_32 = arith.constant dense<0.000000e+00> : vector<128x128xf32>
    %38 = tpu.matmul %36, %37, %cst_32 {dimension_numbers = #tpu.dot_dimension_numbers<[1], [0], [0], [1], [0, 0, 1, 1], [], []>} : vector<128x40xf32>, vector<40x128xf32>, vector<128x128xf32> -> vector<128x128xf32>
    %c0_33 = arith.constant 0 : index
    %c0_34 = arith.constant 0 : index
    %39 = vector.load %arg13[%c0_33, %c0_34] : memref<1x128xf32, #tpu.memory_space<vmem>>, vector<1x128xf32>
    %40 = vector.broadcast %39 : vector<1x128xf32> to vector<128x128xf32>
    %41 = arith.addf %38, %40 : vector<128x128xf32>
    %cst_35 = arith.constant dense<0xFF800000> : vector<128xf32>
    %42 = vector.multi_reduction <maximumf>, %41, %cst_35 [1] : vector<128x128xf32> to vector<128xf32>
    %43 = vector.shape_cast %42 : vector<128xf32> to vector<128x1xf32>
    %44 = vector.broadcast %43 : vector<128x1xf32> to vector<128x128xf32>
    %45 = arith.subf %41, %44 : vector<128x128xf32>
    %46 = math.exp %45 : vector<128x128xf32>
    %cst_36 = arith.constant dense<0.000000e+00> : vector<128xf32>
    %47 = vector.multi_reduction <add>, %46, %cst_36 [1] : vector<128x128xf32> to vector<128xf32>
    %48 = vector.shape_cast %47 : vector<128xf32> to vector<128x1xf32>
    %49 = vector.broadcast %48 : vector<128x1xf32> to vector<128x128xf32>
    %50 = arith.divf %46, %49 : vector<128x128xf32>
    %51 = tpu.transpose %50, [1, 0] : vector<128x128xf32> -> vector<128x128xf32>
    %52 = vector.extract_strided_slice %51 {offsets = [0, 0], sizes = [2, 128], strides = [1, 1]} : vector<128x128xf32> to vector<2x128xf32>
    %c0_37 = arith.constant 0 : index
    %c0_38 = arith.constant 0 : index
    %53 = vector.load %arg14[%c0_37, %c0_38] : memref<2x128xf32, #tpu.memory_space<vmem>>, vector<2x128xf32>
    tpu.vector_store %arg14[%c0_37, %c0_38], %52 {strides = array<i32>} : memref<2x128xf32, #tpu.memory_space<vmem>>, vector<2x128xf32>,
    return
  }
  func.func @transform_0(%arg0: i32) -> (i32, i32) {
    %c0_i32 = arith.constant 0 : i32
    %c0_i32_0 = arith.constant 0 : i32
    return %arg0, %c0_i32 : i32, i32
  }
  func.func @transform_1(%arg0: i32) -> (i32, i32) {
    %c0_i32 = arith.constant 0 : i32
    %c0_i32_0 = arith.constant 0 : i32
    %c0_i32_1 = arith.constant 0 : i32
    return %c0_i32, %c0_i32_0 : i32, i32
  }
  func.func @transform_2(%arg0: i32) -> (i32, i32) {
    %c0_i32 = arith.constant 0 : i32
    %c0_i32_0 = arith.constant 0 : i32
    %c0_i32_1 = arith.constant 0 : i32
    return %c0_i32, %c0_i32_0 : i32, i32
  }
  func.func @transform_3(%arg0: i32) -> (i32, i32) {
    %c0_i32 = arith.constant 0 : i32
    %c0_i32_0 = arith.constant 0 : i32
    %c0_i32_1 = arith.constant 0 : i32
    return %c0_i32, %c0_i32_0 : i32, i32
  }
  func.func @transform_4(%arg0: i32) -> (i32, i32) {
    %c0_i32 = arith.constant 0 : i32
    %c0_i32_0 = arith.constant 0 : i32
    %c0_i32_1 = arith.constant 0 : i32
    return %c0_i32, %c0_i32_0 : i32, i32
  }
  func.func @transform_5(%arg0: i32) -> (i32, i32) {
    %c0_i32 = arith.constant 0 : i32
    %c0_i32_0 = arith.constant 0 : i32
    %c0_i32_1 = arith.constant 0 : i32
    return %c0_i32, %c0_i32_0 : i32, i32
  }
  func.func @transform_6(%arg0: i32) -> (i32, i32) {
    %c0_i32 = arith.constant 0 : i32
    %c0_i32_0 = arith.constant 0 : i32
    %c0_i32_1 = arith.constant 0 : i32
    return %c0_i32, %c0_i32_0 : i32, i32
  }
  func.func @transform_7(%arg0: i32) -> (i32, i32) {
    %c0_i32 = arith.constant 0 : i32
    %c0_i32_0 = arith.constant 0 : i32
    %c0_i32_1 = arith.constant 0 : i32
    return %c0_i32, %c0_i32_0 : i32, i32
  }
  func.func @transform_8(%arg0: i32) -> (i32, i32) {
    %c0_i32 = arith.constant 0 : i32
    %c0_i32_0 = arith.constant 0 : i32
    %c0_i32_1 = arith.constant 0 : i32
    return %c0_i32, %c0_i32_0 : i32, i32
  }
  func.func @transform_9(%arg0: i32) -> (i32, i32) {
    %c0_i32 = arith.constant 0 : i32
    %c0_i32_0 = arith.constant 0 : i32
    %c0_i32_1 = arith.constant 0 : i32
    return %c0_i32, %c0_i32_0 : i32, i32
  }
  func.func @transform_10(%arg0: i32) -> (i32, i32) {
    %c0_i32 = arith.constant 0 : i32
    %c0_i32_0 = arith.constant 0 : i32
    %c0_i32_1 = arith.constant 0 : i32
    return %c0_i32, %c0_i32_0 : i32, i32
  }
  func.func @transform_11(%arg0: i32) -> (i32, i32) {
    %c0_i32 = arith.constant 0 : i32
    %c0_i32_0 = arith.constant 0 : i32
    %c0_i32_1 = arith.constant 0 : i32
    return %c0_i32, %c0_i32_0 : i32, i32
  }
  func.func @transform_12(%arg0: i32) -> (i32, i32) {
    %c0_i32 = arith.constant 0 : i32
    %c0_i32_0 = arith.constant 0 : i32
    %c0_i32_1 = arith.constant 0 : i32
    return %c0_i32, %c0_i32_0 : i32, i32
  }
  func.func @transform_13(%arg0: i32) -> (i32, i32) {
    %c0_i32 = arith.constant 0 : i32
    %c0_i32_0 = arith.constant 0 : i32
    return %c0_i32, %arg0 : i32, i32
  }
}

</mosaic_0001>

<llo_original>
// kernel: tile.10
$region0: #{tile.10}
  #allocation0 [shape = 's32[1]{0}', space=sflag, size = 0x4, scoped, tag = 'scoped memory for tile.10']
  %s0 = inlined_call_operand.vmem [shape: f32[4], index: 0, kind: input, shape index: {}]
  %s1 = inlined_call_operand.vmem [shape: f32[20,4], index: 1, kind: output, shape index: {}]
  // Predicated region
  $region2: #{tile.10} parent=0 // pred_check
    _
  $region3: #{tile.10} parent=0 // pred_check_branch
    %3 = sbr.rel (0) target = $region5
  $region4: #{tile.10} parent=0 // pred_region
    _
  $region5: #{tile.10} parent=0 // pred_fallthru
    _
  %v4 = vld [vmem:[%s0] ss:$0 sm:$0xff]
  %5 = vst [vmem:[%s1] sm:$0xff] %v4
  %s6 = scalar_lea.vmem %s1, 8
  %7 = vst [vmem:[%s6] sm:$0xff] %v4
  %s8 = scalar_lea.vmem %s1, 16
  %9 = vst [vmem:[%s8] sm:$0xff] %v4

// kernel: tile.14
$region0: #{tile.14}
  %s0 = inlined_call_operand.vmem [shape: f32[20,4], index: 0, kind: input, shape index: {}]
  %s1 = inlined_call_operand.vmem [shape: f32[1,80], index: 1, kind: output, shape index: {}]
  $region1: #{tile.14} parent=0
    #allocation0 [shape = 'u8[4096]{0}', space=vmem, size = 0x1000, scoped, tag = 'scoped mem for output reshape']
    %v2 = vld [vmem:[%s0] sm:$0x1]
    %vm3 = vcmask 31744
    %4 = vst.msk [vmem:[#allocation0] sm:$0x1] %vm3, %v2
    %s5 = scalar_lea.vmem %s0, 19
    %v6 = vld [vmem:[%s5] sm:$0x1]
    %7 = vrot.lane.b32.xlu0 %v6, 76
    %v8 = vpop.permute.xlu0 %7
    %vm9 = vcmask 654944
    %10 = vst.msk [vmem:[#allocation0] sm:$0x1] %vm9, %v8
    %s11 = scalar_lea.vmem %s0, 18
    %v12 = vld [vmem:[%s11] sm:$0x1]
    %13 = vrot.lane.b32.xlu0 %v12, 72
    %v14 = vpop.permute.xlu0 %13
    %vm15 = vcmask 622144
    %16 = vst.msk [vmem:[#allocation0] sm:$0x1] %vm15, %v14
    %s17 = scalar_lea.vmem %s0, 17
    %v18 = vld [vmem:[%s17] sm:$0x1]
    %19 = vrot.lane.b32.xlu0 %v18, 68
    %v20 = vpop.permute.xlu0 %19
    %vm21 = vcmask 589344
    %22 = vst.msk [vmem:[#allocation0] sm:$0x1] %vm21, %v20
    %s23 = scalar_lea.vmem %s0, 16
    %v24 = vld [vmem:[%s23] sm:$0x1]
    %25 = vrot.lane.b32.xlu0 %v24, 64
    %v26 = vpop.permute.xlu0 %25
    %vm27 = vcmask 556544
    %28 = vst.msk [vmem:[#allocation0] sm:$0x1] %vm27, %v26
    %s29 = scalar_lea.vmem %s0, 15
    %v30 = vld [vmem:[%s29] sm:$0x1]
    %31 = vrot.lane.b32.xlu0 %v30, 60
    %v32 = vpop.permute.xlu0 %31
    %vm33 = vcmask 523744
    %34 = vst.msk [vmem:[#allocation0] sm:$0x1] %vm33, %v32
    %s35 = scalar_lea.vmem %s0, 14
    %v36 = vld [vmem:[%s35] sm:$0x1]
    %37 = vrot.lane.b32.xlu0 %v36, 56
    %v38 = vpop.permute.xlu0 %37
    %vm39 = vcmask 490944
    %40 = vst.msk [vmem:[#allocation0] sm:$0x1] %vm39, %v38
    %s41 = scalar_lea.vmem %s0, 13
    %v42 = vld [vmem:[%s41] sm:$0x1]
    %43 = vrot.lane.b32.xlu0 %v42, 52
    %v44 = vpop.permute.xlu0 %43
    %vm45 = vcmask 458144
    %46 = vst.msk [vmem:[#allocation0] sm:$0x1] %vm45, %v44
    %s47 = scalar_lea.vmem %s0, 12
    %v48 = vld [vmem:[%s47] sm:$0x1]
    %49 = vrot.lane.b32.xlu0 %v48, 48
    %v50 = vpop.permute.xlu0 %49
    %vm51 = vcmask 425344
    %52 = vst.msk [vmem:[#allocation0] sm:$0x1] %vm51, %v50
    %s53 = scalar_lea.vmem %s0, 11
    %v54 = vld [vmem:[%s53] sm:$0x1]
    %55 = vrot.lane.b32.xlu0 %v54, 44
    %v56 = vpop.permute.xlu0 %55
    %vm57 = vcmask 392544
    %58 = vst.msk [vmem:[#allocation0] sm:$0x1] %vm57, %v56
    %s59 = scalar_lea.vmem %s0, 10
    %v60 = vld [vmem:[%s59] sm:$0x1]
    %61 = vrot.lane.b32.xlu0 %v60, 40
    %v62 = vpop.permute.xlu0 %61
    %vm63 = vcmask 359744
    %64 = vst.msk [vmem:[#allocation0] sm:$0x1] %vm63, %v62
    %s65 = scalar_lea.vmem %s0, 9
    %v66 = vld [vmem:[%s65] sm:$0x1]
    %67 = vrot.lane.b32.xlu0 %v66, 36
    %v68 = vpop.permute.xlu0 %67
    %vm69 = vcmask 326944
    %70 = vst.msk [vmem:[#allocation0] sm:$0x1] %vm69, %v68
    %s71 = scalar_lea.vmem %s0, 8
    %v72 = vld [vmem:[%s71] sm:$0x1]
    %73 = vrot.lane.b32.xlu0 %v72, 32
    %v74 = vpop.permute.xlu0 %73
    %vm75 = vcmask 294144
    %76 = vst.msk [vmem:[#allocation0] sm:$0x1] %vm75, %v74
    %s77 = scalar_lea.vmem %s0, 7
    %v78 = vld [vmem:[%s77] sm:$0x1]
    %79 = vrot.lane.b32.xlu0 %v78, 28
    %v80 = vpop.permute.xlu0 %79
    %vm81 = vcmask 261344
    %82 = vst.msk [vmem:[#allocation0] sm:$0x1] %vm81, %v80
    %s83 = scalar_lea.vmem %s0, 6
    %v84 = vld [vmem:[%s83] sm:$0x1]
    %85 = vrot.lane.b32.xlu0 %v84, 24
    %v86 = vpop.permute.xlu0 %85
    %vm87 = vcmask 228544
    %88 = vst.msk [vmem:[#allocation0] sm:$0x1] %vm87, %v86
    %s89 = scalar_lea.vmem %s0, 5
    %v90 = vld [vmem:[%s89] sm:$0x1]
    %91 = vrot.lane.b32.xlu0 %v90, 20
    %v92 = vpop.permute.xlu0 %91
    %vm93 = vcmask 195744
    %94 = vst.msk [vmem:[#allocation0] sm:$0x1] %vm93, %v92
    %s95 = scalar_lea.vmem %s0, 4
    %v96 = vld [vmem:[%s95] sm:$0x1]
    %97 = vrot.lane.b32.xlu0 %v96, 16
    %v98 = vpop.permute.xlu0 %97
    %vm99 = vcmask 162944
    %100 = vst.msk [vmem:[#allocation0] sm:$0x1] %vm99, %v98
    %s101 = scalar_lea.vmem %s0, 3
    %v102 = vld [vmem:[%s101] sm:$0x1]
    %103 = vrot.lane.b32.xlu0 %v102, 12
    %v104 = vpop.permute.xlu0 %103
    %vm105 = vcmask 130144
    %106 = vst.msk [vmem:[#allocation0] sm:$0x1] %vm105, %v104
    %s107 = scalar_lea.vmem %s0, 2
    %v108 = vld [vmem:[%s107] sm:$0x1]
    %109 = vrot.lane.b32.xlu0 %v108, 8
    %v110 = vpop.permute.xlu0 %109
    %vm111 = vcmask 97344
    %112 = vst.msk [vmem:[#allocation0] sm:$0x1] %vm111, %v110
    %s113 = scalar_lea.vmem %s0, 1
    %v114 = vld [vmem:[%s113] sm:$0x1]
    %115 = vrot.lane.b32.xlu0 %v114, 4
    %v116 = vpop.permute.xlu0 %115
    %vm117 = vcmask 64544
    %118 = vst.msk [vmem:[#allocation0] sm:$0x1] %vm117, %v116
    %s120 = sshll.u32 1, 1
    %s121 = ssub.s32 %s120, 1
    %v123 = vld [vmem:[#allocation0] sm:%s121]
    %s124 = sshll.u32 1, 1
    %s125 = ssub.s32 %s124, 1
    %126 = vst [vmem:[%s1] sm:%s125] %v123

// kernel: tile.15
$region0: #{tile.15}
  %s0 = inlined_call_operand.vmem [shape: f32[20,2], index: 0, kind: input, shape index: {}]
  %s1 = inlined_call_operand.vmem [shape: f32[1,40], index: 1, kind: output, shape index: {}]
  $region1: #{tile.15} parent=0
    #allocation0 [shape = 'u8[4096]{0}', space=vmem, size = 0x1000, scoped, tag = 'scoped mem for output reshape']
    %v2 = vld [vmem:[%s0] sm:$0x1]
    %vm3 = vcmask 15360
    %4 = vst.msk [vmem:[#allocation0] sm:$0x1] %vm3, %v2
    %s5 = scalar_lea.vmem %s0, 19
    %v6 = vld [vmem:[%s5] sm:$0x1]
    %7 = vrot.lane.b32.xlu0 %v6, 38
    %v8 = vpop.permute.xlu0 %7
    %vm9 = vcmask 326960
    %10 = vst.msk [vmem:[#allocation0] sm:$0x1] %vm9, %v8
    %s11 = scalar_lea.vmem %s0, 18
    %v12 = vld [vmem:[%s11] sm:$0x1]
    %13 = vrot.lane.b32.xlu0 %v12, 36
    %v14 = vpop.permute.xlu0 %13
    %vm15 = vcmask 310560
    %16 = vst.msk [vmem:[#allocation0] sm:$0x1] %vm15, %v14
    %s17 = scalar_lea.vmem %s0, 17
    %v18 = vld [vmem:[%s17] sm:$0x1]
    %19 = vrot.lane.b32.xlu0 %v18, 34
    %v20 = vpop.permute.xlu0 %19
    %vm21 = vcmask 294160
    %22 = vst.msk [vmem:[#allocation0] sm:$0x1] %vm21, %v20
    %s23 = scalar_lea.vmem %s0, 16
    %v24 = vld [vmem:[%s23] sm:$0x1]
    %25 = vrot.lane.b32.xlu0 %v24, 32
    %v26 = vpop.permute.xlu0 %25
    %vm27 = vcmask 277760
    %28 = vst.msk [vmem:[#allocation0] sm:$0x1] %vm27, %v26
    %s29 = scalar_lea.vmem %s0, 15
    %v30 = vld [vmem:[%s29] sm:$0x1]
    %31 = vrot.lane.b32.xlu0 %v30, 30
    %v32 = vpop.permute.xlu0 %31
    %vm33 = vcmask 261360
    %34 = vst.msk [vmem:[#allocation0] sm:$0x1] %vm33, %v32
    %s35 = scalar_lea.vmem %s0, 14
    %v36 = vld [vmem:[%s35] sm:$0x1]
    %37 = vrot.lane.b32.xlu0 %v36, 28
    %v38 = vpop.permute.xlu0 %37
    %vm39 = vcmask 244960
    %40 = vst.msk [vmem:[#allocation0] sm:$0x1] %vm39, %v38
    %s41 = scalar_lea.vmem %s0, 13
    %v42 = vld [vmem:[%s41] sm:$0x1]
    %43 = vrot.lane.b32.xlu0 %v42, 26
    %v44 = vpop.permute.xlu0 %43
    %vm45 = vcmask 228560
    %46 = vst.msk [vmem:[#allocation0] sm:$0x1] %vm45, %v44
    %s47 = scalar_lea.vmem %s0, 12
    %v48 = vld [vmem:[%s47] sm:$0x1]
    %49 = vrot.lane.b32.xlu0 %v48, 24
    %v50 = vpop.permute.xlu0 %49
    %vm51 = vcmask 212160
    %52 = vst.msk [vmem:[#allocation0] sm:$0x1] %vm51, %v50
    %s53 = scalar_lea.vmem %s0, 11
    %v54 = vld [vmem:[%s53] sm:$0x1]
    %55 = vrot.lane.b32.xlu0 %v54, 22
    %v56 = vpop.permute.xlu0 %55
    %vm57 = vcmask 195760
    %58 = vst.msk [vmem:[#allocation0] sm:$0x1] %vm57, %v56
    %s59 = scalar_lea.vmem %s0, 10
    %v60 = vld [vmem:[%s59] sm:$0x1]
    %61 = vrot.lane.b32.xlu0 %v60, 20
    %v62 = vpop.permute.xlu0 %61
    %vm63 = vcmask 179360
    %64 = vst.msk [vmem:[#allocation0] sm:$0x1] %vm63, %v62
    %s65 = scalar_lea.vmem %s0, 9
    %v66 = vld [vmem:[%s65] sm:$0x1]
    %67 = vrot.lane.b32.xlu0 %v66, 18
    %v68 = vpop.permute.xlu0 %67
    %vm69 = vcmask 162960
    %70 = vst.msk [vmem:[#allocation0] sm:$0x1] %vm69, %v68
    %s71 = scalar_lea.vmem %s0, 8
    %v72 = vld [vmem:[%s71] sm:$0x1]
    %73 = vrot.lane.b32.xlu0 %v72, 16
    %v74 = vpop.permute.xlu0 %73
    %vm75 = vcmask 146560
    %76 = vst.msk [vmem:[#allocation0] sm:$0x1] %vm75, %v74
    %s77 = scalar_lea.vmem %s0, 7
    %v78 = vld [vmem:[%s77] sm:$0x1]
    %79 = vrot.lane.b32.xlu0 %v78, 14
    %v80 = vpop.permute.xlu0 %79
    %vm81 = vcmask 130160
    %82 = vst.msk [vmem:[#allocation0] sm:$0x1] %vm81, %v80
    %s83 = scalar_lea.vmem %s0, 6
    %v84 = vld [vmem:[%s83] sm:$0x1]
    %85 = vrot.lane.b32.xlu0 %v84, 12
    %v86 = vpop.permute.xlu0 %85
    %vm87 = vcmask 113760
    %88 = vst.msk [vmem:[#allocation0] sm:$0x1] %vm87, %v86
    %s89 = scalar_lea.vmem %s0, 5
    %v90 = vld [vmem:[%s89] sm:$0x1]
    %91 = vrot.lane.b32.xlu0 %v90, 10
    %v92 = vpop.permute.xlu0 %91
    %vm93 = vcmask 97360
    %94 = vst.msk [vmem:[#allocation0] sm:$0x1] %vm93, %v92
    %s95 = scalar_lea.vmem %s0, 4
    %v96 = vld [vmem:[%s95] sm:$0x1]
    %97 = vrot.lane.b32.xlu0 %v96, 8
    %v98 = vpop.permute.xlu0 %97
    %vm99 = vcmask 80960
    %100 = vst.msk [vmem:[#allocation0] sm:$0x1] %vm99, %v98
    %s101 = scalar_lea.vmem %s0, 3
    %v102 = vld [vmem:[%s101] sm:$0x1]
    %103 = vrot.lane.b32.xlu0 %v102, 6
    %v104 = vpop.permute.xlu0 %103
    %vm105 = vcmask 64560
    %106 = vst.msk [vmem:[#allocation0] sm:$0x1] %vm105, %v104
    %s107 = scalar_lea.vmem %s0, 2
    %v108 = vld [vmem:[%s107] sm:$0x1]
    %109 = vrot.lane.b32.xlu0 %v108, 4
    %v110 = vpop.permute.xlu0 %109
    %vm111 = vcmask 48160
    %112 = vst.msk [vmem:[#allocation0] sm:$0x1] %vm111, %v110
    %s113 = scalar_lea.vmem %s0, 1
    %v114 = vld [vmem:[%s113] sm:$0x1]
    %115 = vrot.lane.b32.xlu0 %v114, 2
    %v116 = vpop.permute.xlu0 %115
    %vm117 = vcmask 31760
    %118 = vst.msk [vmem:[#allocation0] sm:$0x1] %vm117, %v116
    %s120 = sshll.u32 1, 1
    %s121 = ssub.s32 %s120, 1
    %v123 = vld [vmem:[#allocation0] sm:%s121]
    %s124 = sshll.u32 1, 1
    %s125 = ssub.s32 %s124, 1
    %126 = vst [vmem:[%s1] sm:%s125] %v123

// kernel: _lambda_.1
$region0: #{_lambda_.1}
  #allocation0 [shape = 'u32[]', space=smem, size = 0x4, offset = 0x4, fixed_abs, tag = 'smem constant byte address 0x4 - core index']
  #allocation1 [shape = 'u32[144,128]{1,0:T(1,128)}', space=vmem, size = 0x12000, scoped, tag = 'internal scratch']
  %s0 = inlined_call_operand.vmem [shape: bf16[128,40], index: 0, kind: input, shape index: {}]
  %s1 = inlined_call_operand.vmem [shape: f32[40,32], index: 1, kind: input, shape index: {}]
  %s2 = inlined_call_operand.vmem [shape: f32[1,32], index: 2, kind: input, shape index: {}]
  %s3 = inlined_call_operand.vmem [shape: f32[32,16], index: 3, kind: input, shape index: {}]
  %s4 = inlined_call_operand.vmem [shape: f32[1,16], index: 4, kind: input, shape index: {}]
  %s5 = inlined_call_operand.vmem [shape: f32[16,40], index: 5, kind: input, shape index: {}]
  %s6 = inlined_call_operand.vmem [shape: f32[1,40], index: 6, kind: input, shape index: {}]
  %s7 = inlined_call_operand.vmem [shape: f32[40,80], index: 7, kind: input, shape index: {}]
  %s8 = inlined_call_operand.vmem [shape: f32[1,80], index: 8, kind: input, shape index: {}]
  %s9 = inlined_call_operand.vmem [shape: f32[80,40], index: 9, kind: input, shape index: {}]
  %s10 = inlined_call_operand.vmem [shape: f32[1,40], index: 10, kind: input, shape index: {}]
  %s11 = inlined_call_operand.vmem [shape: f32[40,128], index: 11, kind: input, shape index: {}]
  %s12 = inlined_call_operand.vmem [shape: f32[1,128], index: 12, kind: input, shape index: {}]
  %s13 = inlined_call_operand.hbm [shape: f32[2,128], index: 13, kind: output, shape index: {}]
  %s14 = sld [smem:[#allocation0]]
  $region62: #{_lambda_.1} parent=0
    _
  %s16 = ssub.s32 1, %s14
  %s17 = scalar_select 0, %s16, %s14
  $region1: #{_lambda_.1} parent=0
    #allocation2 [shape = 'u8[1024]{0}', space=vmem, size = 0x400, scoped, tag = 'output window, operand 0, single buffered']
    #allocation3 [shape = 's32[1]{0}', space=sflag, size = 0x4, scoped, tag = 'scoped memory for _lambda_.1']
    %18 = vsyncpa [#allocation3], 0
    // Predicated region
    $region2: #{_lambda_.1} parent=1 // pred_check
      _
    $region3: #{_lambda_.1} parent=1 // pred_check_branch
      %20 = sbr.rel (0) target = $region5
    $region4: #{_lambda_.1} parent=1 // pred_region
      _
    $region5: #{_lambda_.1} parent=1 // pred_fallthru
      _
    // Predicated region
    $region6: #{_lambda_.1} parent=1 // pred_check
      _
    $region7: #{_lambda_.1} parent=1 // pred_check_branch
      %22 = sbr.rel (0) target = $region9
    $region8: #{_lambda_.1} parent=1 // pred_region
      _
    $region9: #{_lambda_.1} parent=1 // pred_fallthru
      _
    // Predicated region
    $region10: #{_lambda_.1} parent=1 // pred_check
      _
    $region11: #{_lambda_.1} parent=1 // pred_check_branch
      %24 = sbr.rel (0) target = $region13
    $region12: #{_lambda_.1} parent=1 // pred_region
      _
    $region13: #{_lambda_.1} parent=1 // pred_fallthru
      _
    // Predicated region
    $region14: #{_lambda_.1} parent=1 // pred_check
      _
    $region15: #{_lambda_.1} parent=1 // pred_check_branch
      %26 = sbr.rel (0) target = $region17
    $region16: #{_lambda_.1} parent=1 // pred_region
      _
    $region17: #{_lambda_.1} parent=1 // pred_fallthru
      _
    // Predicated region
    $region18: #{_lambda_.1} parent=1 // pred_check
      _
    $region19: #{_lambda_.1} parent=1 // pred_check_branch
      %28 = sbr.rel (0) target = $region21
    $region20: #{_lambda_.1} parent=1 // pred_region
      _
    $region21: #{_lambda_.1} parent=1 // pred_fallthru
      _
    // Predicated region
    $region22: #{_lambda_.1} parent=1 // pred_check
      _
    $region23: #{_lambda_.1} parent=1 // pred_check_branch
      %30 = sbr.rel (0) target = $region25
    $region24: #{_lambda_.1} parent=1 // pred_region
      _
    $region25: #{_lambda_.1} parent=1 // pred_fallthru
      _
    // Predicated region
    $region26: #{_lambda_.1} parent=1 // pred_check
      _
    $region27: #{_lambda_.1} parent=1 // pred_check_branch
      %32 = sbr.rel (0) target = $region29
    $region28: #{_lambda_.1} parent=1 // pred_region
      _
    $region29: #{_lambda_.1} parent=1 // pred_fallthru
      _
    // Predicated region
    $region30: #{_lambda_.1} parent=1 // pred_check
      _
    $region31: #{_lambda_.1} parent=1 // pred_check_branch
      %34 = sbr.rel (0) target = $region33
    $region32: #{_lambda_.1} parent=1 // pred_region
      _
    $region33: #{_lambda_.1} parent=1 // pred_fallthru
      _
    // Predicated region
    $region34: #{_lambda_.1} parent=1 // pred_check
      _
    $region35: #{_lambda_.1} parent=1 // pred_check_branch
      %36 = sbr.rel (0) target = $region37
    $region36: #{_lambda_.1} parent=1 // pred_region
      _
    $region37: #{_lambda_.1} parent=1 // pred_fallthru
      _
    // Predicated region
    $region38: #{_lambda_.1} parent=1 // pred_check
      _
    $region39: #{_lambda_.1} parent=1 // pred_check_branch
      %38 = sbr.rel (0) target = $region41
    $region40: #{_lambda_.1} parent=1 // pred_region
      _
    $region41: #{_lambda_.1} parent=1 // pred_fallthru
      _
    // Predicated region
    $region42: #{_lambda_.1} parent=1 // pred_check
      _
    $region43: #{_lambda_.1} parent=1 // pred_check_branch
      %40 = sbr.rel (0) target = $region45
    $region44: #{_lambda_.1} parent=1 // pred_region
      _
    $region45: #{_lambda_.1} parent=1 // pred_fallthru
      _
    // Predicated region
    $region46: #{_lambda_.1} parent=1 // pred_check
      _
    $region47: #{_lambda_.1} parent=1 // pred_check_branch
      %42 = sbr.rel (0) target = $region49
    $region48: #{_lambda_.1} parent=1 // pred_region
      _
    $region49: #{_lambda_.1} parent=1 // pred_fallthru
      _
    // Predicated region
    $region50: #{_lambda_.1} parent=1 // pred_check
      _
    $region51: #{_lambda_.1} parent=1 // pred_check_branch
      %44 = sbr.rel (0) target = $region53
    $region52: #{_lambda_.1} parent=1 // pred_region
      _
    $region53: #{_lambda_.1} parent=1 // pred_fallthru
      _
    %v45 = vld [vmem:[%s0] sm:$0xf]
    %v46 = vld [vmem:[%s0 + $0x4] sm:$0xf]
    %v47 = vld [vmem:[%s0 + $0x8] sm:$0xf]
    %v48 = vld [vmem:[%s0 + $0xc] sm:$0xf]
    %v49 = vld [vmem:[%s0 + $0x10] sm:$0xf]
    %v50 = vld [vmem:[%s0 + $0x14] sm:$0xf]
    %v51 = vld [vmem:[%s0 + $0x18] sm:$0xf]
    %v52 = vld [vmem:[%s0 + $0x1c] sm:$0xf]
    %v53 = vld [vmem:[%s0 + $0x20] sm:$0xf]
    %v54 = vld [vmem:[%s0 + $0x24] sm:$0xf]
    %v55 = vld [vmem:[%s0 + $0x28] sm:$0xf]
    %v56 = vld [vmem:[%s0 + $0x2c] sm:$0xf]
    %v57 = vld [vmem:[%s0 + $0x30] sm:$0xf]
    %v58 = vld [vmem:[%s0 + $0x34] sm:$0xf]
    %v59 = vld [vmem:[%s0 + $0x38] sm:$0xf]
    %v60 = vld [vmem:[%s0 + $0x3c] sm:$0xf]
    %v61 = vunpack.c.l.bf16 %v45
    %v62 = vunpack.c.l.bf16 %v46
    %v63 = vunpack.c.l.bf16 %v47
    %v64 = vunpack.c.l.bf16 %v48
    %v65 = vunpack.c.l.bf16 %v49
    %v66 = vunpack.c.l.bf16 %v50
    %v67 = vunpack.c.l.bf16 %v51
    %v68 = vunpack.c.l.bf16 %v52
    %v69 = vunpack.c.l.bf16 %v53
    %v70 = vunpack.c.l.bf16 %v54
    %v71 = vunpack.c.l.bf16 %v55
    %v72 = vunpack.c.l.bf16 %v56
    %v73 = vunpack.c.l.bf16 %v57
    %v74 = vunpack.c.l.bf16 %v58
    %v75 = vunpack.c.l.bf16 %v59
    %v76 = vunpack.c.l.bf16 %v60
    %v77 = vld [vmem:[%s1] sm:$0xff]
    %v78 = vld [vmem:[%s1 + $0x8] sm:$0xff]
    %v79 = vld [vmem:[%s1 + $0x10] sm:$0xff]
    %v80 = vld [vmem:[%s1 + $0x18] sm:$0xff]
    %v81 = vld [vmem:[%s1 + $0x20] sm:$0xff]
    %v82 = vld [vmem:[%s2] sm:$0x1]
    %v84 = vlaneseq
    %v85 = vshrl.u32 %v84, 7
    %v86 = vsub.s32 0, %v85
    %v87 = vrot.slane %v82, %v86
    %vm89 = vcmask 326656
    %v91 = vsel %vm89, %v61, 0
    %v94 = vsel %vm89, %v62, 0
    %v97 = vsel %vm89, %v63, 0
    %v100 = vsel %vm89, %v64, 0
    %v103 = vsel %vm89, %v65, 0
    %v106 = vsel %vm89, %v66, 0
    %v109 = vsel %vm89, %v67, 0
    %v112 = vsel %vm89, %v68, 0
    %v115 = vsel %vm89, %v69, 0
    %v118 = vsel %vm89, %v70, 0
    %v121 = vsel %vm89, %v71, 0
    %v124 = vsel %vm89, %v72, 0
    %v127 = vsel %vm89, %v73, 0
    %v130 = vsel %vm89, %v74, 0
    %v133 = vsel %vm89, %v75, 0
    %v136 = vsel %vm89, %v76, 0
    %138 = vmatprep.subr.mxu0 0.0
    %139 = vmatpush1.msra.mxu0 0.0
    %140 = vmatprep.subr.mxu0 0.0
    %141 = vmatpush1.msra.mxu0 0.0
    %142 = vmatprep.subr.mxu0 0.0
    %143 = vmatpush1.msra.mxu0 0.0
    %144 = vmatprep.subr.mxu0 0.0
    %145 = vmatpush1.msra.mxu0 0.0
    %146 = vmatprep.subr.mxu0 0.0
    %147 = vmatpush1.msra.mxu0 0.0
    %148 = vmatprep.subr.mxu0 0.0
    %149 = vmatpush1.msra.mxu0 0.0
    %150 = vmatprep.subr.mxu0 0.0
    %151 = vmatpush1.msra.mxu0 0.0
    %152 = vmatprep.subr.mxu0 0.0
    %153 = vmatpush1.msra.mxu0 0.0
    %154 = vmatprep.subr.mxu0 0.0
    %155 = vmatpush1.msra.mxu0 0.0
    %156 = vmatprep.subr.mxu0 0.0
    %157 = vmatpush1.msra.mxu0 0.0
    %158 = vmatprep.subr.mxu0 0.0
    %159 = vmatpush1.msra.mxu0 0.0
    %160 = vmatprep.subr.mxu0 0.0
    %161 = vmatpush1.msra.mxu0 %v81
    %162 = vmatprep.subr.mxu0 0.0
    %163 = vmatpush1.msra.mxu0 %v80
    %164 = vmatprep.subr.mxu0 0.0
    %165 = vmatpush1.msra.mxu0 %v79
    %166 = vmatprep.subr.mxu0 0.0
    %167 = vmatpush1.msra.mxu0 %v78
    %168 = vmatprep.subr.mxu0 0.0
    %169 = vmatpush1.msra.mxu0 %v77
    %170 = vmatprep.subr.mxu0 0.0
    %171 = vmatpush2.msra.mxu0 0.0
    %172 = vmatprep.subr.mxu0 0.0
    %173 = vmatpush2.msra.mxu0 0.0
    %174 = vmatprep.subr.mxu0 0.0
    %175 = vmatpush2.msra.mxu0 0.0
    %176 = vmatprep.subr.mxu0 0.0
    %177 = vmatpush2.msra.mxu0 0.0
    %178 = vmatprep.subr.mxu0 0.0
    %179 = vmatpush2.msra.mxu0 0.0
    %180 = vmatprep.subr.mxu0 0.0
    %181 = vmatpush2.msra.mxu0 0.0
    %182 = vmatprep.subr.mxu0 0.0
    %183 = vmatpush2.msra.mxu0 0.0
    %184 = vmatprep.subr.mxu0 0.0
    %185 = vmatpush2.msra.mxu0 0.0
    %186 = vmatprep.subr.mxu0 0.0
    %187 = vmatpush2.msra.mxu0 0.0
    %188 = vmatprep.subr.mxu0 0.0
    %189 = vmatpush2.msra.mxu0 0.0
    %190 = vmatprep.subr.mxu0 0.0
    %191 = vmatpush2.msra.mxu0 0.0
    %192 = vmatprep.subr.mxu0 0.0
    %193 = vmatpush2.msra.mxu0 0.0
    %194 = vmatprep.subr.mxu0 0.0
    %195 = vmatpush2.msra.mxu0 0.0
    %196 = vmatprep.subr.mxu0 0.0
    %197 = vmatpush2.msra.mxu0 0.0
    %198 = vmatprep.subr.mxu0 0.0
    %199 = vmatpush2.msra.mxu0 0.0
    %200 = vmatprep.subr.mxu0 0.0
    %201 = vmatpush2.msra.mxu0 0.0
    %202 = vmatprep.mubr.f32.mxu0 0.0
    %203 = vmatmul.mubr.f32.gmra.mxu0 %v91
    %v204 = vpop.f32.mrf.mxu0
    %v205 = vadd.f32 %v87, %v204
    %v206 = vpop.f32.mrf.mxu0
    %207 = vmatprep.mubr.f32.mxu0 0.0
    %208 = vmatmul.mubr.f32.gmra.mxu0 %v94
    %v209 = vpop.f32.mrf.mxu0
    %v210 = vadd.f32 %v87, %v209
    %v211 = vpop.f32.mrf.mxu0
    %212 = vmatprep.mubr.f32.mxu0 0.0
    %213 = vmatmul.mubr.f32.gmra.mxu0 %v97
    %v214 = vpop.f32.mrf.mxu0
    %v215 = vadd.f32 %v87, %v214
    %v216 = vpop.f32.mrf.mxu0
    %217 = vmatprep.mubr.f32.mxu0 0.0
    %218 = vmatmul.mubr.f32.gmra.mxu0 %v100
    %v219 = vpop.f32.mrf.mxu0
    %v220 = vadd.f32 %v87, %v219
    %v221 = vpop.f32.mrf.mxu0
    %222 = vmatprep.mubr.f32.mxu0 0.0
    %223 = vmatmul.mubr.f32.gmra.mxu0 %v103
    %v224 = vpop.f32.mrf.mxu0
    %v225 = vadd.f32 %v87, %v224
    %v226 = vpop.f32.mrf.mxu0
    %227 = vmatprep.mubr.f32.mxu0 0.0
    %228 = vmatmul.mubr.f32.gmra.mxu0 %v106
    %v229 = vpop.f32.mrf.mxu0
    %v230 = vadd.f32 %v87, %v229
    %v231 = vpop.f32.mrf.mxu0
    %232 = vmatprep.mubr.f32.mxu0 0.0
    %233 = vmatmul.mubr.f32.gmra.mxu0 %v109
    %v234 = vpop.f32.mrf.mxu0
    %v235 = vadd.f32 %v87, %v234
    %v236 = vpop.f32.mrf.mxu0
    %237 = vmatprep.mubr.f32.mxu0 0.0
    %238 = vmatmul.mubr.f32.gmra.mxu0 %v112
    %v239 = vpop.f32.mrf.mxu0
    %v240 = vadd.f32 %v87, %v239
    %v241 = vpop.f32.mrf.mxu0
    %242 = vmatprep.mubr.f32.mxu0 0.0
    %243 = vmatmul.mubr.f32.gmra.mxu0 %v115
    %v244 = vpop.f32.mrf.mxu0
    %v245 = vadd.f32 %v87, %v244
    %v246 = vpop.f32.mrf.mxu0
    %247 = vmatprep.mubr.f32.mxu0 0.0
    %248 = vmatmul.mubr.f32.gmra.mxu0 %v118
    %v249 = vpop.f32.mrf.mxu0
    %v250 = vadd.f32 %v87, %v249
    %v251 = vpop.f32.mrf.mxu0
    %252 = vmatprep.mubr.f32.mxu0 0.0
    %253 = vmatmul.mubr.f32.gmra.mxu0 %v121
    %v254 = vpop.f32.mrf.mxu0
    %v255 = vadd.f32 %v87, %v254
    %v256 = vpop.f32.mrf.mxu0
    %257 = vmatprep.mubr.f32.mxu0 0.0
    %258 = vmatmul.mubr.f32.gmra.mxu0 %v124
    %v259 = vpop.f32.mrf.mxu0
    %v260 = vadd.f32 %v87, %v259
    %v261 = vpop.f32.mrf.mxu0
    %262 = vmatprep.mubr.f32.mxu0 0.0
    %263 = vmatmul.mubr.f32.gmra.mxu0 %v127
    %v264 = vpop.f32.mrf.mxu0
    %v265 = vadd.f32 %v87, %v264
    %v266 = vpop.f32.mrf.mxu0
    %267 = vmatprep.mubr.f32.mxu0 0.0
    %268 = vmatmul.mubr.f32.gmra.mxu0 %v130
    %v269 = vpop.f32.mrf.mxu0
    %v270 = vadd.f32 %v87, %v269
    %v271 = vpop.f32.mrf.mxu0
    %272 = vmatprep.mubr.f32.mxu0 0.0
    %273 = vmatmul.mubr.f32.gmra.mxu0 %v133
    %v274 = vpop.f32.mrf.mxu0
    %v275 = vadd.f32 %v87, %v274
    %v276 = vpop.f32.mrf.mxu0
    %277 = vmatprep.mubr.f32.mxu0 0.0
    %278 = vmatmul.mubr.f32.gmra.mxu0 %v136
    %v279 = vpop.f32.mrf.mxu0
    %v280 = vadd.f32 %v87, %v279
    %v281 = vpop.f32.mrf.mxu0
    %282 = vdwg.mxu0
    %v283 = vmax.f32 %v205, 0.0
    %v284 = vmax.f32 %v210, 0.0
    %v285 = vmax.f32 %v215, 0.0
    %v286 = vmax.f32 %v220, 0.0
    %v287 = vmax.f32 %v225, 0.0
    %v288 = vmax.f32 %v230, 0.0
    %v289 = vmax.f32 %v235, 0.0
    %v290 = vmax.f32 %v240, 0.0
    %v291 = vmax.f32 %v245, 0.0
    %v292 = vmax.f32 %v250, 0.0
    %v293 = vmax.f32 %v255, 0.0
    %v294 = vmax.f32 %v260, 0.0
    %v295 = vmax.f32 %v265, 0.0
    %v296 = vmax.f32 %v270, 0.0
    %v297 = vmax.f32 %v275, 0.0
    %v298 = vmax.f32 %v280, 0.0
    %v299 = vld [vmem:[%s3] sm:$0xff]
    %v300 = vld [vmem:[%s3 + $0x8] sm:$0xff]
    %v301 = vld [vmem:[%s3 + $0x10] sm:$0xff]
    %v302 = vld [vmem:[%s3 + $0x18] sm:$0xff]
    %v303 = vld [vmem:[%s4] sm:$0x1]
    %v305 = vlaneseq
    %v306 = vshrl.u32 %v305, 7
    %v307 = vsub.s32 0, %v306
    %v308 = vrot.slane %v303, %v307
    %vm310 = vcmask 261120
    %v312 = vsel %vm310, %v283, 0
    %v315 = vsel %vm310, %v284, 0
    %v318 = vsel %vm310, %v285, 0
    %v321 = vsel %vm310, %v286, 0
    %v324 = vsel %vm310, %v287, 0
    %v327 = vsel %vm310, %v288, 0
    %v330 = vsel %vm310, %v289, 0
    %v333 = vsel %vm310, %v290, 0
    %v336 = vsel %vm310, %v291, 0
    %v339 = vsel %vm310, %v292, 0
    %v342 = vsel %vm310, %v293, 0
    %v345 = vsel %vm310, %v294, 0
    %v348 = vsel %vm310, %v295, 0
    %v351 = vsel %vm310, %v296, 0
    %v354 = vsel %vm310, %v297, 0
    %v357 = vsel %vm310, %v298, 0
    %359 = vmatprep.subr.mxu0 0.0
    %360 = vmatpush1.msra.mxu0 0.0
    %361 = vmatprep.subr.mxu0 0.0
    %362 = vmatpush1.msra.mxu0 0.0
    %363 = vmatprep.subr.mxu0 0.0
    %364 = vmatpush1.msra.mxu0 0.0
    %365 = vmatprep.subr.mxu0 0.0
    %366 = vmatpush1.msra.mxu0 0.0
    %367 = vmatprep.subr.mxu0 0.0
    %368 = vmatpush1.msra.mxu0 0.0
    %369 = vmatprep.subr.mxu0 0.0
    %370 = vmatpush1.msra.mxu0 0.0
    %371 = vmatprep.subr.mxu0 0.0
    %372 = vmatpush1.msra.mxu0 0.0
    %373 = vmatprep.subr.mxu0 0.0
    %374 = vmatpush1.msra.mxu0 0.0
    %375 = vmatprep.subr.mxu0 0.0
    %376 = vmatpush1.msra.mxu0 0.0
    %377 = vmatprep.subr.mxu0 0.0
    %378 = vmatpush1.msra.mxu0 0.0
    %379 = vmatprep.subr.mxu0 0.0
    %380 = vmatpush1.msra.mxu0 0.0
    %381 = vmatprep.subr.mxu0 0.0
    %382 = vmatpush1.msra.mxu0 0.0
    %383 = vmatprep.subr.mxu0 0.0
    %384 = vmatpush1.msra.mxu0 %v302
    %385 = vmatprep.subr.mxu0 0.0
    %386 = vmatpush1.msra.mxu0 %v301
    %387 = vmatprep.subr.mxu0 0.0
    %388 = vmatpush1.msra.mxu0 %v300
    %389 = vmatprep.subr.mxu0 0.0
    %390 = vmatpush1.msra.mxu0 %v299
    %391 = vmatprep.subr.mxu0 0.0
    %392 = vmatpush2.msra.mxu0 0.0
    %393 = vmatprep.subr.mxu0 0.0
    %394 = vmatpush2.msra.mxu0 0.0
    %395 = vmatprep.subr.mxu0 0.0
    %396 = vmatpush2.msra.mxu0 0.0
    %397 = vmatprep.subr.mxu0 0.0
    %398 = vmatpush2.msra.mxu0 0.0
    %399 = vmatprep.subr.mxu0 0.0
    %400 = vmatpush2.msra.mxu0 0.0
    %401 = vmatprep.subr.mxu0 0.0
    %402 = vmatpush2.msra.mxu0 0.0
    %403 = vmatprep.subr.mxu0 0.0
    %404 = vmatpush2.msra.mxu0 0.0
    %405 = vmatprep.subr.mxu0 0.0
    %406 = vmatpush2.msra.mxu0 0.0
    %407 = vmatprep.subr.mxu0 0.0
    %408 = vmatpush2.msra.mxu0 0.0
    %409 = vmatprep.subr.mxu0 0.0
    %410 = vmatpush2.msra.mxu0 0.0
    %411 = vmatprep.subr.mxu0 0.0
    %412 = vmatpush2.msra.mxu0 0.0
    %413 = vmatprep.subr.mxu0 0.0
    %414 = vmatpush2.msra.mxu0 0.0
    %415 = vmatprep.subr.mxu0 0.0
    %416 = vmatpush2.msra.mxu0 0.0
    %417 = vmatprep.subr.mxu0 0.0
    %418 = vmatpush2.msra.mxu0 0.0
    %419 = vmatprep.subr.mxu0 0.0
    %420 = vmatpush2.msra.mxu0 0.0
    %421 = vmatprep.subr.mxu0 0.0
    %422 = vmatpush2.msra.mxu0 0.0
    %423 = vmatprep.mubr.f32.mxu0 0.0
    %424 = vmatmul.mubr.f32.gmra.mxu0 %v312
    %v425 = vpop.f32.mrf.mxu0
    %v426 = vadd.f32 %v308, %v425
    %v427 = vpop.f32.mrf.mxu0
    %428 = vmatprep.mubr.f32.mxu0 0.0
    %429 = vmatmul.mubr.f32.gmra.mxu0 %v315
    %v430 = vpop.f32.mrf.mxu0
    %v431 = vadd.f32 %v308, %v430
    %v432 = vpop.f32.mrf.mxu0
    %433 = vmatprep.mubr.f32.mxu0 0.0
    %434 = vmatmul.mubr.f32.gmra.mxu0 %v318
    %v435 = vpop.f32.mrf.mxu0
    %v436 = vadd.f32 %v308, %v435
    %v437 = vpop.f32.mrf.mxu0
    %438 = vmatprep.mubr.f32.mxu0 0.0
    %439 = vmatmul.mubr.f32.gmra.mxu0 %v321
    %v440 = vpop.f32.mrf.mxu0
    %v441 = vadd.f32 %v308, %v440
    %v442 = vpop.f32.mrf.mxu0
    %443 = vmatprep.mubr.f32.mxu0 0.0
    %444 = vmatmul.mubr.f32.gmra.mxu0 %v324
    %v445 = vpop.f32.mrf.mxu0
    %v446 = vadd.f32 %v308, %v445
    %v447 = vpop.f32.mrf.mxu0
    %448 = vmatprep.mubr.f32.mxu0 0.0
    %449 = vmatmul.mubr.f32.gmra.mxu0 %v327
    %v450 = vpop.f32.mrf.mxu0
    %v451 = vadd.f32 %v308, %v450
    %v452 = vpop.f32.mrf.mxu0
    %453 = vmatprep.mubr.f32.mxu0 0.0
    %454 = vmatmul.mubr.f32.gmra.mxu0 %v330
    %v455 = vpop.f32.mrf.mxu0
    %v456 = vadd.f32 %v308, %v455
    %v457 = vpop.f32.mrf.mxu0
    %458 = vmatprep.mubr.f32.mxu0 0.0
    %459 = vmatmul.mubr.f32.gmra.mxu0 %v333
    %v460 = vpop.f32.mrf.mxu0
    %v461 = vadd.f32 %v308, %v460
    %v462 = vpop.f32.mrf.mxu0
    %463 = vmatprep.mubr.f32.mxu0 0.0
    %464 = vmatmul.mubr.f32.gmra.mxu0 %v336
    %v465 = vpop.f32.mrf.mxu0
    %v466 = vadd.f32 %v308, %v465
    %v467 = vpop.f32.mrf.mxu0
    %468 = vmatprep.mubr.f32.mxu0 0.0
    %469 = vmatmul.mubr.f32.gmra.mxu0 %v339
    %v470 = vpop.f32.mrf.mxu0
    %v471 = vadd.f32 %v308, %v470
    %v472 = vpop.f32.mrf.mxu0
    %473 = vmatprep.mubr.f32.mxu0 0.0
    %474 = vmatmul.mubr.f32.gmra.mxu0 %v342
    %v475 = vpop.f32.mrf.mxu0
    %v476 = vadd.f32 %v308, %v475
    %v477 = vpop.f32.mrf.mxu0
    %478 = vmatprep.mubr.f32.mxu0 0.0
    %479 = vmatmul.mubr.f32.gmra.mxu0 %v345
    %v480 = vpop.f32.mrf.mxu0
    %v481 = vadd.f32 %v308, %v480
    %v482 = vpop.f32.mrf.mxu0
    %483 = vmatprep.mubr.f32.mxu0 0.0
    %484 = vmatmul.mubr.f32.gmra.mxu0 %v348
    %v485 = vpop.f32.mrf.mxu0
    %v486 = vadd.f32 %v308, %v485
    %v487 = vpop.f32.mrf.mxu0
    %488 = vmatprep.mubr.f32.mxu0 0.0
    %489 = vmatmul.mubr.f32.gmra.mxu0 %v351
    %v490 = vpop.f32.mrf.mxu0
    %v491 = vadd.f32 %v308, %v490
    %v492 = vpop.f32.mrf.mxu0
    %493 = vmatprep.mubr.f32.mxu0 0.0
    %494 = vmatmul.mubr.f32.gmra.mxu0 %v354
    %v495 = vpop.f32.mrf.mxu0
    %v496 = vadd.f32 %v308, %v495
    %v497 = vpop.f32.mrf.mxu0
    %498 = vmatprep.mubr.f32.mxu0 0.0
    %499 = vmatmul.mubr.f32.gmra.mxu0 %v357
    %v500 = vpop.f32.mrf.mxu0
    %v501 = vadd.f32 %v308, %v500
    %v502 = vpop.f32.mrf.mxu0
    %503 = vdwg.mxu0
    %v504 = vmax.f32 %v426, 0.0
    %v505 = vmax.f32 %v431, 0.0
    %v506 = vmax.f32 %v436, 0.0
    %v507 = vmax.f32 %v441, 0.0
    %v508 = vmax.f32 %v446, 0.0
    %v509 = vmax.f32 %v451, 0.0
    %v510 = vmax.f32 %v456, 0.0
    %v511 = vmax.f32 %v461, 0.0
    %v512 = vmax.f32 %v466, 0.0
    %v513 = vmax.f32 %v471, 0.0
    %v514 = vmax.f32 %v476, 0.0
    %v515 = vmax.f32 %v481, 0.0
    %v516 = vmax.f32 %v486, 0.0
    %v517 = vmax.f32 %v491, 0.0
    %v518 = vmax.f32 %v496, 0.0
    %v519 = vmax.f32 %v501, 0.0
    %v520 = vld [vmem:[%s5] sm:$0xff]
    %v521 = vld [vmem:[%s5 + $0x8] sm:$0xff]
    %v522 = vld [vmem:[%s6] sm:$0x1]
    %v524 = vlaneseq
    %v525 = vshrl.u32 %v524, 7
    %v526 = vsub.s32 0, %v525
    %v527 = vrot.slane %v522, %v526
    %vm529 = vcmask 130048
    %v531 = vsel %vm529, %v504, 0
    %v534 = vsel %vm529, %v505, 0
    %v537 = vsel %vm529, %v506, 0
    %v540 = vsel %vm529, %v507, 0
    %v543 = vsel %vm529, %v508, 0
    %v546 = vsel %vm529, %v509, 0
    %v549 = vsel %vm529, %v510, 0
    %v552 = vsel %vm529, %v511, 0
    %v555 = vsel %vm529, %v512, 0
    %v558 = vsel %vm529, %v513, 0
    %v561 = vsel %vm529, %v514, 0
    %v564 = vsel %vm529, %v515, 0
    %v567 = vsel %vm529, %v516, 0
    %v570 = vsel %vm529, %v517, 0
    %v573 = vsel %vm529, %v518, 0
    %v576 = vsel %vm529, %v519, 0
    %578 = vmatprep.subr.mxu0 0.0
    %579 = vmatpush1.msra.mxu0 0.0
    %580 = vmatprep.subr.mxu0 0.0
    %581 = vmatpush1.msra.mxu0 0.0
    %582 = vmatprep.subr.mxu0 0.0
    %583 = vmatpush1.msra.mxu0 0.0
    %584 = vmatprep.subr.mxu0 0.0
    %585 = vmatpush1.msra.mxu0 0.0
    %586 = vmatprep.subr.mxu0 0.0
    %587 = vmatpush1.msra.mxu0 0.0
    %588 = vmatprep.subr.mxu0 0.0
    %589 = vmatpush1.msra.mxu0 0.0
    %590 = vmatprep.subr.mxu0 0.0
    %591 = vmatpush1.msra.mxu0 0.0
    %592 = vmatprep.subr.mxu0 0.0
    %593 = vmatpush1.msra.mxu0 0.0
    %594 = vmatprep.subr.mxu0 0.0
    %595 = vmatpush1.msra.mxu0 0.0
    %596 = vmatprep.subr.mxu0 0.0
    %597 = vmatpush1.msra.mxu0 0.0
    %598 = vmatprep.subr.mxu0 0.0
    %599 = vmatpush1.msra.mxu0 0.0
    %600 = vmatprep.subr.mxu0 0.0
    %601 = vmatpush1.msra.mxu0 0.0
    %602 = vmatprep.subr.mxu0 0.0
    %603 = vmatpush1.msra.mxu0 0.0
    %604 = vmatprep.subr.mxu0 0.0
    %605 = vmatpush1.msra.mxu0 0.0
    %606 = vmatprep.subr.mxu0 0.0
    %607 = vmatpush1.msra.mxu0 %v521
    %608 = vmatprep.subr.mxu0 0.0
    %609 = vmatpush1.msra.mxu0 %v520
    %610 = vmatprep.subr.mxu0 0.0
    %611 = vmatpush2.msra.mxu0 0.0
    %612 = vmatprep.subr.mxu0 0.0
    %613 = vmatpush2.msra.mxu0 0.0
    %614 = vmatprep.subr.mxu0 0.0
    %615 = vmatpush2.msra.mxu0 0.0
    %616 = vmatprep.subr.mxu0 0.0
    %617 = vmatpush2.msra.mxu0 0.0
    %618 = vmatprep.subr.mxu0 0.0
    %619 = vmatpush2.msra.mxu0 0.0
    %620 = vmatprep.subr.mxu0 0.0
    %621 = vmatpush2.msra.mxu0 0.0
    %622 = vmatprep.subr.mxu0 0.0
    %623 = vmatpush2.msra.mxu0 0.0
    %624 = vmatprep.subr.mxu0 0.0
    %625 = vmatpush2.msra.mxu0 0.0
    %626 = vmatprep.subr.mxu0 0.0
    %627 = vmatpush2.msra.mxu0 0.0
    %628 = vmatprep.subr.mxu0 0.0
    %629 = vmatpush2.msra.mxu0 0.0
    %630 = vmatprep.subr.mxu0 0.0
    %631 = vmatpush2.msra.mxu0 0.0
    %632 = vmatprep.subr.mxu0 0.0
    %633 = vmatpush2.msra.mxu0 0.0
    %634 = vmatprep.subr.mxu0 0.0
    %635 = vmatpush2.msra.mxu0 0.0
    %636 = vmatprep.subr.mxu0 0.0
    %637 = vmatpush2.msra.mxu0 0.0
    %638 = vmatprep.subr.mxu0 0.0
    %639 = vmatpush2.msra.mxu0 0.0
    %640 = vmatprep.subr.mxu0 0.0
    %641 = vmatpush2.msra.mxu0 0.0
    %642 = vmatprep.mubr.f32.mxu0 0.0
    %643 = vmatmul.mubr.f32.gmra.mxu0 %v531
    %v644 = vpop.f32.mrf.mxu0
    %v645 = vadd.f32 %v527, %v644
    %v646 = vpop.f32.mrf.mxu0
    %647 = vmatprep.mubr.f32.mxu0 0.0
    %648 = vmatmul.mubr.f32.gmra.mxu0 %v534
    %v649 = vpop.f32.mrf.mxu0
    %v650 = vadd.f32 %v527, %v649
    %v651 = vpop.f32.mrf.mxu0
    %652 = vmatprep.mubr.f32.mxu0 0.0
    %653 = vmatmul.mubr.f32.gmra.mxu0 %v537
    %v654 = vpop.f32.mrf.mxu0
    %v655 = vadd.f32 %v527, %v654
    %v656 = vpop.f32.mrf.mxu0
    %657 = vmatprep.mubr.f32.mxu0 0.0
    %658 = vmatmul.mubr.f32.gmra.mxu0 %v540
    %v659 = vpop.f32.mrf.mxu0
    %v660 = vadd.f32 %v527, %v659
    %v661 = vpop.f32.mrf.mxu0
    %662 = vmatprep.mubr.f32.mxu0 0.0
    %663 = vmatmul.mubr.f32.gmra.mxu0 %v543
    %v664 = vpop.f32.mrf.mxu0
    %v665 = vadd.f32 %v527, %v664
    %v666 = vpop.f32.mrf.mxu0
    %667 = vmatprep.mubr.f32.mxu0 0.0
    %668 = vmatmul.mubr.f32.gmra.mxu0 %v546
    %v669 = vpop.f32.mrf.mxu0
    %v670 = vadd.f32 %v527, %v669
    %v671 = vpop.f32.mrf.mxu0
    %672 = vmatprep.mubr.f32.mxu0 0.0
    %673 = vmatmul.mubr.f32.gmra.mxu0 %v549
    %v674 = vpop.f32.mrf.mxu0
    %v675 = vadd.f32 %v527, %v674
    %v676 = vpop.f32.mrf.mxu0
    %677 = vmatprep.mubr.f32.mxu0 0.0
    %678 = vmatmul.mubr.f32.gmra.mxu0 %v552
    %v679 = vpop.f32.mrf.mxu0
    %v680 = vadd.f32 %v527, %v679
    %v681 = vpop.f32.mrf.mxu0
    %682 = vmatprep.mubr.f32.mxu0 0.0
    %683 = vmatmul.mubr.f32.gmra.mxu0 %v555
    %v684 = vpop.f32.mrf.mxu0
    %v685 = vadd.f32 %v527, %v684
    %v686 = vpop.f32.mrf.mxu0
    %687 = vmatprep.mubr.f32.mxu0 0.0
    %688 = vmatmul.mubr.f32.gmra.mxu0 %v558
    %v689 = vpop.f32.mrf.mxu0
    %v690 = vadd.f32 %v527, %v689
    %v691 = vpop.f32.mrf.mxu0
    %692 = vmatprep.mubr.f32.mxu0 0.0
    %693 = vmatmul.mubr.f32.gmra.mxu0 %v561
    %v694 = vpop.f32.mrf.mxu0
    %v695 = vadd.f32 %v527, %v694
    %v696 = vpop.f32.mrf.mxu0
    %697 = vmatprep.mubr.f32.mxu0 0.0
    %698 = vmatmul.mubr.f32.gmra.mxu0 %v564
    %v699 = vpop.f32.mrf.mxu0
    %v700 = vadd.f32 %v527, %v699
    %v701 = vpop.f32.mrf.mxu0
    %702 = vmatprep.mubr.f32.mxu0 0.0
    %703 = vmatmul.mubr.f32.gmra.mxu0 %v567
    %v704 = vpop.f32.mrf.mxu0
    %v705 = vadd.f32 %v527, %v704
    %v706 = vpop.f32.mrf.mxu0
    %707 = vmatprep.mubr.f32.mxu0 0.0
    %708 = vmatmul.mubr.f32.gmra.mxu0 %v570
    %v709 = vpop.f32.mrf.mxu0
    %v710 = vadd.f32 %v527, %v709
    %v711 = vpop.f32.mrf.mxu0
    %712 = vmatprep.mubr.f32.mxu0 0.0
    %713 = vmatmul.mubr.f32.gmra.mxu0 %v573
    %v714 = vpop.f32.mrf.mxu0
    %v715 = vadd.f32 %v527, %v714
    %v716 = vpop.f32.mrf.mxu0
    %717 = vmatprep.mubr.f32.mxu0 0.0
    %718 = vmatmul.mubr.f32.gmra.mxu0 %v576
    %v719 = vpop.f32.mrf.mxu0
    %v720 = vadd.f32 %v527, %v719
    %v721 = vpop.f32.mrf.mxu0
    %722 = vdwg.mxu0
    %v723 = vmax.f32 %v645, 0.0
    %v724 = vmax.f32 %v650, 0.0
    %v725 = vmax.f32 %v655, 0.0
    %v726 = vmax.f32 %v660, 0.0
    %v727 = vmax.f32 %v665, 0.0
    %v728 = vmax.f32 %v670, 0.0
    %v729 = vmax.f32 %v675, 0.0
    %v730 = vmax.f32 %v680, 0.0
    %v731 = vmax.f32 %v685, 0.0
    %v732 = vmax.f32 %v690, 0.0
    %v733 = vmax.f32 %v695, 0.0
    %v734 = vmax.f32 %v700, 0.0
    %v735 = vmax.f32 %v705, 0.0
    %v736 = vmax.f32 %v710, 0.0
    %v737 = vmax.f32 %v715, 0.0
    %v738 = vmax.f32 %v720, 0.0
    %v739 = vld [vmem:[%s7] sm:$0xff]
    %v740 = vld [vmem:[%s7 + $0x8] sm:$0xff]
    %v741 = vld [vmem:[%s7 + $0x10] sm:$0xff]
    %v742 = vld [vmem:[%s7 + $0x18] sm:$0xff]
    %v743 = vld [vmem:[%s7 + $0x20] sm:$0xff]
    %v744 = vld [vmem:[%s8] sm:$0x1]
    %v746 = vlaneseq
    %v747 = vshrl.u32 %v746, 7
    %v748 = vsub.s32 0, %v747
    %v749 = vrot.slane %v744, %v748
    %v752 = vsel %vm89, %v723, 0
    %v755 = vsel %vm89, %v724, 0
    %v758 = vsel %vm89, %v725, 0
    %v761 = vsel %vm89, %v726, 0
    %v764 = vsel %vm89, %v727, 0
    %v767 = vsel %vm89, %v728, 0
    %v770 = vsel %vm89, %v729, 0
    %v773 = vsel %vm89, %v730, 0
    %v776 = vsel %vm89, %v731, 0
    %v779 = vsel %vm89, %v732, 0
    %v782 = vsel %vm89, %v733, 0
    %v785 = vsel %vm89, %v734, 0
    %v788 = vsel %vm89, %v735, 0
    %v791 = vsel %vm89, %v736, 0
    %v794 = vsel %vm89, %v737, 0
    %v797 = vsel %vm89, %v738, 0
    %799 = vmatprep.subr.mxu0 0.0
    %800 = vmatpush1.msra.mxu0 0.0
    %801 = vmatprep.subr.mxu0 0.0
    %802 = vmatpush1.msra.mxu0 0.0
    %803 = vmatprep.subr.mxu0 0.0
    %804 = vmatpush1.msra.mxu0 0.0
    %805 = vmatprep.subr.mxu0 0.0
    %806 = vmatpush1.msra.mxu0 0.0
    %807 = vmatprep.subr.mxu0 0.0
    %808 = vmatpush1.msra.mxu0 0.0
    %809 = vmatprep.subr.mxu0 0.0
    %810 = vmatpush1.msra.mxu0 0.0
    %811 = vmatprep.subr.mxu0 0.0
    %812 = vmatpush1.msra.mxu0 0.0
    %813 = vmatprep.subr.mxu0 0.0
    %814 = vmatpush1.msra.mxu0 0.0
    %815 = vmatprep.subr.mxu0 0.0
    %816 = vmatpush1.msra.mxu0 0.0
    %817 = vmatprep.subr.mxu0 0.0
    %818 = vmatpush1.msra.mxu0 0.0
    %819 = vmatprep.subr.mxu0 0.0
    %820 = vmatpush1.msra.mxu0 0.0
    %821 = vmatprep.subr.mxu0 0.0
    %822 = vmatpush1.msra.mxu0 %v743
    %823 = vmatprep.subr.mxu0 0.0
    %824 = vmatpush1.msra.mxu0 %v742
    %825 = vmatprep.subr.mxu0 0.0
    %826 = vmatpush1.msra.mxu0 %v741
    %827 = vmatprep.subr.mxu0 0.0
    %828 = vmatpush1.msra.mxu0 %v740
    %829 = vmatprep.subr.mxu0 0.0
    %830 = vmatpush1.msra.mxu0 %v739
    %831 = vmatprep.subr.mxu0 0.0
    %832 = vmatpush2.msra.mxu0 0.0
    %833 = vmatprep.subr.mxu0 0.0
    %834 = vmatpush2.msra.mxu0 0.0
    %835 = vmatprep.subr.mxu0 0.0
    %836 = vmatpush2.msra.mxu0 0.0
    %837 = vmatprep.subr.mxu0 0.0
    %838 = vmatpush2.msra.mxu0 0.0
    %839 = vmatprep.subr.mxu0 0.0
    %840 = vmatpush2.msra.mxu0 0.0
    %841 = vmatprep.subr.mxu0 0.0
    %842 = vmatpush2.msra.mxu0 0.0
    %843 = vmatprep.subr.mxu0 0.0
    %844 = vmatpush2.msra.mxu0 0.0
    %845 = vmatprep.subr.mxu0 0.0
    %846 = vmatpush2.msra.mxu0 0.0
    %847 = vmatprep.subr.mxu0 0.0
    %848 = vmatpush2.msra.mxu0 0.0
    %849 = vmatprep.subr.mxu0 0.0
    %850 = vmatpush2.msra.mxu0 0.0
    %851 = vmatprep.subr.mxu0 0.0
    %852 = vmatpush2.msra.mxu0 0.0
    %853 = vmatprep.subr.mxu0 0.0
    %854 = vmatpush2.msra.mxu0 0.0
    %855 = vmatprep.subr.mxu0 0.0
    %856 = vmatpush2.msra.mxu0 0.0
    %857 = vmatprep.subr.mxu0 0.0
    %858 = vmatpush2.msra.mxu0 0.0
    %859 = vmatprep.subr.mxu0 0.0
    %860 = vmatpush2.msra.mxu0 0.0
    %861 = vmatprep.subr.mxu0 0.0
    %862 = vmatpush2.msra.mxu0 0.0
    %863 = vmatprep.mubr.f32.mxu0 0.0
    %864 = vmatmul.mubr.f32.gmra.mxu0 %v752
    %v865 = vpop.f32.mrf.mxu0
    %v866 = vadd.f32 %v749, %v865
    %v867 = vpop.f32.mrf.mxu0
    %868 = vmatprep.mubr.f32.mxu0 0.0
    %869 = vmatmul.mubr.f32.gmra.mxu0 %v755
    %v870 = vpop.f32.mrf.mxu0
    %v871 = vadd.f32 %v749, %v870
    %v872 = vpop.f32.mrf.mxu0
    %873 = vmatprep.mubr.f32.mxu0 0.0
    %874 = vmatmul.mubr.f32.gmra.mxu0 %v758
    %v875 = vpop.f32.mrf.mxu0
    %v876 = vadd.f32 %v749, %v875
    %v877 = vpop.f32.mrf.mxu0
    %878 = vmatprep.mubr.f32.mxu0 0.0
    %879 = vmatmul.mubr.f32.gmra.mxu0 %v761
    %v880 = vpop.f32.mrf.mxu0
    %v881 = vadd.f32 %v749, %v880
    %v882 = vpop.f32.mrf.mxu0
    %883 = vmatprep.mubr.f32.mxu0 0.0
    %884 = vmatmul.mubr.f32.gmra.mxu0 %v764
    %v885 = vpop.f32.mrf.mxu0
    %v886 = vadd.f32 %v749, %v885
    %v887 = vpop.f32.mrf.mxu0
    %888 = vmatprep.mubr.f32.mxu0 0.0
    %889 = vmatmul.mubr.f32.gmra.mxu0 %v767
    %v890 = vpop.f32.mrf.mxu0
    %v891 = vadd.f32 %v749, %v890
    %v892 = vpop.f32.mrf.mxu0
    %893 = vmatprep.mubr.f32.mxu0 0.0
    %894 = vmatmul.mubr.f32.gmra.mxu0 %v770
    %v895 = vpop.f32.mrf.mxu0
    %v896 = vadd.f32 %v749, %v895
    %v897 = vpop.f32.mrf.mxu0
    %898 = vmatprep.mubr.f32.mxu0 0.0
    %899 = vmatmul.mubr.f32.gmra.mxu0 %v773
    %v900 = vpop.f32.mrf.mxu0
    %v901 = vadd.f32 %v749, %v900
    %v902 = vpop.f32.mrf.mxu0
    %903 = vmatprep.mubr.f32.mxu0 0.0
    %904 = vmatmul.mubr.f32.gmra.mxu0 %v776
    %v905 = vpop.f32.mrf.mxu0
    %v906 = vadd.f32 %v749, %v905
    %v907 = vpop.f32.mrf.mxu0
    %908 = vmatprep.mubr.f32.mxu0 0.0
    %909 = vmatmul.mubr.f32.gmra.mxu0 %v779
    %v910 = vpop.f32.mrf.mxu0
    %v911 = vadd.f32 %v749, %v910
    %v912 = vpop.f32.mrf.mxu0
    %913 = vmatprep.mubr.f32.mxu0 0.0
    %914 = vmatmul.mubr.f32.gmra.mxu0 %v782
    %v915 = vpop.f32.mrf.mxu0
    %v916 = vadd.f32 %v749, %v915
    %v917 = vpop.f32.mrf.mxu0
    %918 = vmatprep.mubr.f32.mxu0 0.0
    %919 = vmatmul.mubr.f32.gmra.mxu0 %v785
    %v920 = vpop.f32.mrf.mxu0
    %v921 = vadd.f32 %v749, %v920
    %v922 = vpop.f32.mrf.mxu0
    %923 = vmatprep.mubr.f32.mxu0 0.0
    %924 = vmatmul.mubr.f32.gmra.mxu0 %v788
    %v925 = vpop.f32.mrf.mxu0
    %v926 = vadd.f32 %v749, %v925
    %v927 = vpop.f32.mrf.mxu0
    %928 = vmatprep.mubr.f32.mxu0 0.0
    %929 = vmatmul.mubr.f32.gmra.mxu0 %v791
    %v930 = vpop.f32.mrf.mxu0
    %v931 = vadd.f32 %v749, %v930
    %v932 = vpop.f32.mrf.mxu0
    %933 = vmatprep.mubr.f32.mxu0 0.0
    %934 = vmatmul.mubr.f32.gmra.mxu0 %v794
    %v935 = vpop.f32.mrf.mxu0
    %v936 = vadd.f32 %v749, %v935
    %v937 = vpop.f32.mrf.mxu0
    %938 = vmatprep.mubr.f32.mxu0 0.0
    %939 = vmatmul.mubr.f32.gmra.mxu0 %v797
    %v940 = vpop.f32.mrf.mxu0
    %v941 = vadd.f32 %v749, %v940
    %v942 = vpop.f32.mrf.mxu0
    %943 = vdwg.mxu0
    %v944 = vmax.f32 %v866, 0.0
    %v945 = vmax.f32 %v871, 0.0
    %v946 = vmax.f32 %v876, 0.0
    %v947 = vmax.f32 %v881, 0.0
    %v948 = vmax.f32 %v886, 0.0
    %v949 = vmax.f32 %v891, 0.0
    %v950 = vmax.f32 %v896, 0.0
    %v951 = vmax.f32 %v901, 0.0
    %v952 = vmax.f32 %v906, 0.0
    %v953 = vmax.f32 %v911, 0.0
    %v954 = vmax.f32 %v916, 0.0
    %v955 = vmax.f32 %v921, 0.0
    %v956 = vmax.f32 %v926, 0.0
    %v957 = vmax.f32 %v931, 0.0
    %v958 = vmax.f32 %v936, 0.0
    %v959 = vmax.f32 %v941, 0.0
    %v960 = vld [vmem:[%s9] sm:$0xff]
    %v961 = vld [vmem:[%s9 + $0x8] sm:$0xff]
    %v962 = vld [vmem:[%s9 + $0x10] sm:$0xff]
    %v963 = vld [vmem:[%s9 + $0x18] sm:$0xff]
    %v964 = vld [vmem:[%s9 + $0x20] sm:$0xff]
    %v965 = vld [vmem:[%s9 + $0x28] sm:$0xff]
    %v966 = vld [vmem:[%s9 + $0x30] sm:$0xff]
    %v967 = vld [vmem:[%s9 + $0x38] sm:$0xff]
    %v968 = vld [vmem:[%s9 + $0x40] sm:$0xff]
    %v969 = vld [vmem:[%s9 + $0x48] sm:$0xff]
    %v970 = vld [vmem:[%s10] sm:$0x1]
    %v972 = vlaneseq
    %v973 = vshrl.u32 %v972, 7
    %v974 = vsub.s32 0, %v973
    %v975 = vrot.slane %v970, %v974
    %vm977 = vcmask 654336
    %v979 = vsel %vm977, %v944, 0
    %v982 = vsel %vm977, %v945, 0
    %v985 = vsel %vm977, %v946, 0
    %v988 = vsel %vm977, %v947, 0
    %v991 = vsel %vm977, %v948, 0
    %v994 = vsel %vm977, %v949, 0
    %v997 = vsel %vm977, %v950, 0
    %v1000 = vsel %vm977, %v951, 0
    %v1003 = vsel %vm977, %v952, 0
    %v1006 = vsel %vm977, %v953, 0
    %v1009 = vsel %vm977, %v954, 0
    %v1012 = vsel %vm977, %v955, 0
    %v1015 = vsel %vm977, %v956, 0
    %v1018 = vsel %vm977, %v957, 0
    %v1021 = vsel %vm977, %v958, 0
    %v1024 = vsel %vm977, %v959, 0
    %1026 = vmatprep.subr.mxu0 0.0
    %1027 = vmatpush1.msra.mxu0 0.0
    %1028 = vmatprep.subr.mxu0 0.0
    %1029 = vmatpush1.msra.mxu0 0.0
    %1030 = vmatprep.subr.mxu0 0.0
    %1031 = vmatpush1.msra.mxu0 0.0
    %1032 = vmatprep.subr.mxu0 0.0
    %1033 = vmatpush1.msra.mxu0 0.0
    %1034 = vmatprep.subr.mxu0 0.0
    %1035 = vmatpush1.msra.mxu0 0.0
    %1036 = vmatprep.subr.mxu0 0.0
    %1037 = vmatpush1.msra.mxu0 0.0
    %1038 = vmatprep.subr.mxu0 0.0
    %1039 = vmatpush1.msra.mxu0 %v969
    %1040 = vmatprep.subr.mxu0 0.0
    %1041 = vmatpush1.msra.mxu0 %v968
    %1042 = vmatprep.subr.mxu0 0.0
    %1043 = vmatpush1.msra.mxu0 %v967
    %1044 = vmatprep.subr.mxu0 0.0
    %1045 = vmatpush1.msra.mxu0 %v966
    %1046 = vmatprep.subr.mxu0 0.0
    %1047 = vmatpush1.msra.mxu0 %v965
    %1048 = vmatprep.subr.mxu0 0.0
    %1049 = vmatpush1.msra.mxu0 %v964
    %1050 = vmatprep.subr.mxu0 0.0
    %1051 = vmatpush1.msra.mxu0 %v963
    %1052 = vmatprep.subr.mxu0 0.0
    %1053 = vmatpush1.msra.mxu0 %v962
    %1054 = vmatprep.subr.mxu0 0.0
    %1055 = vmatpush1.msra.mxu0 %v961
    %1056 = vmatprep.subr.mxu0 0.0
    %1057 = vmatpush1.msra.mxu0 %v960
    %1058 = vmatprep.subr.mxu0 0.0
    %1059 = vmatpush2.msra.mxu0 0.0
    %1060 = vmatprep.subr.mxu0 0.0
    %1061 = vmatpush2.msra.mxu0 0.0
    %1062 = vmatprep.subr.mxu0 0.0
    %1063 = vmatpush2.msra.mxu0 0.0
    %1064 = vmatprep.subr.mxu0 0.0
    %1065 = vmatpush2.msra.mxu0 0.0
    %1066 = vmatprep.subr.mxu0 0.0
    %1067 = vmatpush2.msra.mxu0 0.0
    %1068 = vmatprep.subr.mxu0 0.0
    %1069 = vmatpush2.msra.mxu0 0.0
    %1070 = vmatprep.subr.mxu0 0.0
    %1071 = vmatpush2.msra.mxu0 0.0
    %1072 = vmatprep.subr.mxu0 0.0
    %1073 = vmatpush2.msra.mxu0 0.0
    %1074 = vmatprep.subr.mxu0 0.0
    %1075 = vmatpush2.msra.mxu0 0.0
    %1076 = vmatprep.subr.mxu0 0.0
    %1077 = vmatpush2.msra.mxu0 0.0
    %1078 = vmatprep.subr.mxu0 0.0
    %1079 = vmatpush2.msra.mxu0 0.0
    %1080 = vmatprep.subr.mxu0 0.0
    %1081 = vmatpush2.msra.mxu0 0.0
    %1082 = vmatprep.subr.mxu0 0.0
    %1083 = vmatpush2.msra.mxu0 0.0
    %1084 = vmatprep.subr.mxu0 0.0
    %1085 = vmatpush2.msra.mxu0 0.0
    %1086 = vmatprep.subr.mxu0 0.0
    %1087 = vmatpush2.msra.mxu0 0.0
    %1088 = vmatprep.subr.mxu0 0.0
    %1089 = vmatpush2.msra.mxu0 0.0
    %1090 = vmatprep.mubr.f32.mxu0 0.0
    %1091 = vmatmul.mubr.f32.gmra.mxu0 %v979
    %v1092 = vpop.f32.mrf.mxu0
    %v1093 = vadd.f32 %v975, %v1092
    %v1094 = vpop.f32.mrf.mxu0
    %1095 = vmatprep.mubr.f32.mxu0 0.0
    %1096 = vmatmul.mubr.f32.gmra.mxu0 %v982
    %v1097 = vpop.f32.mrf.mxu0
    %v1098 = vadd.f32 %v975, %v1097
    %v1099 = vpop.f32.mrf.mxu0
    %1100 = vmatprep.mubr.f32.mxu0 0.0
    %1101 = vmatmul.mubr.f32.gmra.mxu0 %v985
    %v1102 = vpop.f32.mrf.mxu0
    %v1103 = vadd.f32 %v975, %v1102
    %v1104 = vpop.f32.mrf.mxu0
    %1105 = vmatprep.mubr.f32.mxu0 0.0
    %1106 = vmatmul.mubr.f32.gmra.mxu0 %v988
    %v1107 = vpop.f32.mrf.mxu0
    %v1108 = vadd.f32 %v975, %v1107
    %v1109 = vpop.f32.mrf.mxu0
    %1110 = vmatprep.mubr.f32.mxu0 0.0
    %1111 = vmatmul.mubr.f32.gmra.mxu0 %v991
    %v1112 = vpop.f32.mrf.mxu0
    %v1113 = vadd.f32 %v975, %v1112
    %v1114 = vpop.f32.mrf.mxu0
    %1115 = vmatprep.mubr.f32.mxu0 0.0
    %1116 = vmatmul.mubr.f32.gmra.mxu0 %v994
    %v1117 = vpop.f32.mrf.mxu0
    %v1118 = vadd.f32 %v975, %v1117
    %v1119 = vpop.f32.mrf.mxu0
    %1120 = vmatprep.mubr.f32.mxu0 0.0
    %1121 = vmatmul.mubr.f32.gmra.mxu0 %v997
    %v1122 = vpop.f32.mrf.mxu0
    %v1123 = vadd.f32 %v975, %v1122
    %v1124 = vpop.f32.mrf.mxu0
    %1125 = vmatprep.mubr.f32.mxu0 0.0
    %1126 = vmatmul.mubr.f32.gmra.mxu0 %v1000
    %v1127 = vpop.f32.mrf.mxu0
    %v1128 = vadd.f32 %v975, %v1127
    %v1129 = vpop.f32.mrf.mxu0
    %1130 = vmatprep.mubr.f32.mxu0 0.0
    %1131 = vmatmul.mubr.f32.gmra.mxu0 %v1003
    %v1132 = vpop.f32.mrf.mxu0
    %v1133 = vadd.f32 %v975, %v1132
    %v1134 = vpop.f32.mrf.mxu0
    %1135 = vmatprep.mubr.f32.mxu0 0.0
    %1136 = vmatmul.mubr.f32.gmra.mxu0 %v1006
    %v1137 = vpop.f32.mrf.mxu0
    %v1138 = vadd.f32 %v975, %v1137
    %v1139 = vpop.f32.mrf.mxu0
    %1140 = vmatprep.mubr.f32.mxu0 0.0
    %1141 = vmatmul.mubr.f32.gmra.mxu0 %v1009
    %v1142 = vpop.f32.mrf.mxu0
    %v1143 = vadd.f32 %v975, %v1142
    %v1144 = vpop.f32.mrf.mxu0
    %1145 = vmatprep.mubr.f32.mxu0 0.0
    %1146 = vmatmul.mubr.f32.gmra.mxu0 %v1012
    %v1147 = vpop.f32.mrf.mxu0
    %v1148 = vadd.f32 %v975, %v1147
    %v1149 = vpop.f32.mrf.mxu0
    %1150 = vmatprep.mubr.f32.mxu0 0.0
    %1151 = vmatmul.mubr.f32.gmra.mxu0 %v1015
    %v1152 = vpop.f32.mrf.mxu0
    %v1153 = vadd.f32 %v975, %v1152
    %v1154 = vpop.f32.mrf.mxu0
    %1155 = vmatprep.mubr.f32.mxu0 0.0
    %1156 = vmatmul.mubr.f32.gmra.mxu0 %v1018
    %v1157 = vpop.f32.mrf.mxu0
    %v1158 = vadd.f32 %v975, %v1157
    %v1159 = vpop.f32.mrf.mxu0
    %1160 = vmatprep.mubr.f32.mxu0 0.0
    %1161 = vmatmul.mubr.f32.gmra.mxu0 %v1021
    %v1162 = vpop.f32.mrf.mxu0
    %v1163 = vadd.f32 %v975, %v1162
    %v1164 = vpop.f32.mrf.mxu0
    %1165 = vmatprep.mubr.f32.mxu0 0.0
    %1166 = vmatmul.mubr.f32.gmra.mxu0 %v1024
    %v1167 = vpop.f32.mrf.mxu0
    %v1168 = vadd.f32 %v975, %v1167
    %v1169 = vpop.f32.mrf.mxu0
    %1170 = vdwg.mxu0
    %v1171 = vmax.f32 %v1093, 0.0
    %v1172 = vmax.f32 %v1098, 0.0
    %v1173 = vmax.f32 %v1103, 0.0
    %v1174 = vmax.f32 %v1108, 0.0
    %v1175 = vmax.f32 %v1113, 0.0
    %v1176 = vmax.f32 %v1118, 0.0
    %v1177 = vmax.f32 %v1123, 0.0
    %v1178 = vmax.f32 %v1128, 0.0
    %v1179 = vmax.f32 %v1133, 0.0
    %v1180 = vmax.f32 %v1138, 0.0
    %v1181 = vmax.f32 %v1143, 0.0
    %v1182 = vmax.f32 %v1148, 0.0
    %v1183 = vmax.f32 %v1153, 0.0
    %v1184 = vmax.f32 %v1158, 0.0
    %v1185 = vmax.f32 %v1163, 0.0
    %v1186 = vmax.f32 %v1168, 0.0
    %v1187 = vld [vmem:[%s11] sm:$0xff]
    %v1188 = vld [vmem:[%s11 + $0x8] sm:$0xff]
    %v1189 = vld [vmem:[%s11 + $0x10] sm:$0xff]
    %v1190 = vld [vmem:[%s11 + $0x18] sm:$0xff]
    %v1191 = vld [vmem:[%s11 + $0x20] sm:$0xff]
    %v1192 = vld [vmem:[%s12] sm:$0x1]
    %v1194 = vlaneseq
    %v1195 = vshrl.u32 %v1194, 7
    %v1196 = vsub.s32 0, %v1195
    %v1197 = vrot.slane %v1192, %v1196
    %v1200 = vsel %vm89, %v1171, 0
    %v1203 = vsel %vm89, %v1172, 0
    %v1206 = vsel %vm89, %v1173, 0
    %v1209 = vsel %vm89, %v1174, 0
    %v1212 = vsel %vm89, %v1175, 0
    %v1215 = vsel %vm89, %v1176, 0
    %v1218 = vsel %vm89, %v1177, 0
    %v1221 = vsel %vm89, %v1178, 0
    %v1224 = vsel %vm89, %v1179, 0
    %v1227 = vsel %vm89, %v1180, 0
    %v1230 = vsel %vm89, %v1181, 0
    %v1233 = vsel %vm89, %v1182, 0
    %v1236 = vsel %vm89, %v1183, 0
    %v1239 = vsel %vm89, %v1184, 0
    %v1242 = vsel %vm89, %v1185, 0
    %v1245 = vsel %vm89, %v1186, 0
    %1247 = vmatprep.subr.mxu0 0.0
    %1248 = vmatpush1.msra.mxu0 0.0
    %1249 = vmatprep.subr.mxu0 0.0
    %1250 = vmatpush1.msra.mxu0 0.0
    %1251 = vmatprep.subr.mxu0 0.0
    %1252 = vmatpush1.msra.mxu0 0.0
    %1253 = vmatprep.subr.mxu0 0.0
    %1254 = vmatpush1.msra.mxu0 0.0
    %1255 = vmatprep.subr.mxu0 0.0
    %1256 = vmatpush1.msra.mxu0 0.0
    %1257 = vmatprep.subr.mxu0 0.0
    %1258 = vmatpush1.msra.mxu0 0.0
    %1259 = vmatprep.subr.mxu0 0.0
    %1260 = vmatpush1.msra.mxu0 0.0
    %1261 = vmatprep.subr.mxu0 0.0
    %1262 = vmatpush1.msra.mxu0 0.0
    %1263 = vmatprep.subr.mxu0 0.0
    %1264 = vmatpush1.msra.mxu0 0.0
    %1265 = vmatprep.subr.mxu0 0.0
    %1266 = vmatpush1.msra.mxu0 0.0
    %1267 = vmatprep.subr.mxu0 0.0
    %1268 = vmatpush1.msra.mxu0 0.0
    %1269 = vmatprep.subr.mxu0 0.0
    %1270 = vmatpush1.msra.mxu0 %v1191
    %1271 = vmatprep.subr.mxu0 0.0
    %1272 = vmatpush1.msra.mxu0 %v1190
    %1273 = vmatprep.subr.mxu0 0.0
    %1274 = vmatpush1.msra.mxu0 %v1189
    %1275 = vmatprep.subr.mxu0 0.0
    %1276 = vmatpush1.msra.mxu0 %v1188
    %1277 = vmatprep.subr.mxu0 0.0
    %1278 = vmatpush1.msra.mxu0 %v1187
    %1279 = vmatprep.subr.mxu0 0.0
    %1280 = vmatpush2.msra.mxu0 0.0
    %1281 = vmatprep.subr.mxu0 0.0
    %1282 = vmatpush2.msra.mxu0 0.0
    %1283 = vmatprep.subr.mxu0 0.0
    %1284 = vmatpush2.msra.mxu0 0.0
    %1285 = vmatprep.subr.mxu0 0.0
    %1286 = vmatpush2.msra.mxu0 0.0
    %1287 = vmatprep.subr.mxu0 0.0
    %1288 = vmatpush2.msra.mxu0 0.0
    %1289 = vmatprep.subr.mxu0 0.0
    %1290 = vmatpush2.msra.mxu0 0.0
    %1291 = vmatprep.subr.mxu0 0.0
    %1292 = vmatpush2.msra.mxu0 0.0
    %1293 = vmatprep.subr.mxu0 0.0
    %1294 = vmatpush2.msra.mxu0 0.0
    %1295 = vmatprep.subr.mxu0 0.0
    %1296 = vmatpush2.msra.mxu0 0.0
    %1297 = vmatprep.subr.mxu0 0.0
    %1298 = vmatpush2.msra.mxu0 0.0
    %1299 = vmatprep.subr.mxu0 0.0
    %1300 = vmatpush2.msra.mxu0 0.0
    %1301 = vmatprep.subr.mxu0 0.0
    %1302 = vmatpush2.msra.mxu0 0.0
    %1303 = vmatprep.subr.mxu0 0.0
    %1304 = vmatpush2.msra.mxu0 0.0
    %1305 = vmatprep.subr.mxu0 0.0
    %1306 = vmatpush2.msra.mxu0 0.0
    %1307 = vmatprep.subr.mxu0 0.0
    %1308 = vmatpush2.msra.mxu0 0.0
    %1309 = vmatprep.subr.mxu0 0.0
    %1310 = vmatpush2.msra.mxu0 0.0
    %1311 = vmatprep.mubr.f32.mxu0 0.0
    %1312 = vmatmul.mubr.f32.gmra.mxu0 %v1200
    %v1313 = vpop.f32.mrf.mxu0
    %v1314 = vadd.f32 %v1197, %v1313
    %v1315 = vpop.f32.mrf.mxu0
    %1316 = vmatprep.mubr.f32.mxu0 0.0
    %1317 = vmatmul.mubr.f32.gmra.mxu0 %v1203
    %v1318 = vpop.f32.mrf.mxu0
    %v1319 = vadd.f32 %v1197, %v1318
    %v1320 = vpop.f32.mrf.mxu0
    %1321 = vmatprep.mubr.f32.mxu0 0.0
    %1322 = vmatmul.mubr.f32.gmra.mxu0 %v1206
    %v1323 = vpop.f32.mrf.mxu0
    %v1324 = vadd.f32 %v1197, %v1323
    %v1325 = vpop.f32.mrf.mxu0
    %1326 = vmatprep.mubr.f32.mxu0 0.0
    %1327 = vmatmul.mubr.f32.gmra.mxu0 %v1209
    %v1328 = vpop.f32.mrf.mxu0
    %v1329 = vadd.f32 %v1197, %v1328
    %v1330 = vpop.f32.mrf.mxu0
    %1331 = vmatprep.mubr.f32.mxu0 0.0
    %1332 = vmatmul.mubr.f32.gmra.mxu0 %v1212
    %v1333 = vpop.f32.mrf.mxu0
    %v1334 = vadd.f32 %v1197, %v1333
    %v1335 = vpop.f32.mrf.mxu0
    %1336 = vmatprep.mubr.f32.mxu0 0.0
    %1337 = vmatmul.mubr.f32.gmra.mxu0 %v1215
    %v1338 = vpop.f32.mrf.mxu0
    %v1339 = vadd.f32 %v1197, %v1338
    %v1340 = vpop.f32.mrf.mxu0
    %1341 = vmatprep.mubr.f32.mxu0 0.0
    %1342 = vmatmul.mubr.f32.gmra.mxu0 %v1218
    %v1343 = vpop.f32.mrf.mxu0
    %v1344 = vadd.f32 %v1197, %v1343
    %v1345 = vpop.f32.mrf.mxu0
    %1346 = vmatprep.mubr.f32.mxu0 0.0
    %1347 = vmatmul.mubr.f32.gmra.mxu0 %v1221
    %v1348 = vpop.f32.mrf.mxu0
    %v1349 = vadd.f32 %v1197, %v1348
    %v1350 = vpop.f32.mrf.mxu0
    %1351 = vmatprep.mubr.f32.mxu0 0.0
    %1352 = vmatmul.mubr.f32.gmra.mxu0 %v1224
    %v1353 = vpop.f32.mrf.mxu0
    %v1354 = vadd.f32 %v1197, %v1353
    %v1355 = vpop.f32.mrf.mxu0
    %1356 = vmatprep.mubr.f32.mxu0 0.0
    %1357 = vmatmul.mubr.f32.gmra.mxu0 %v1227
    %v1358 = vpop.f32.mrf.mxu0
    %v1359 = vadd.f32 %v1197, %v1358
    %v1360 = vpop.f32.mrf.mxu0
    %1361 = vmatprep.mubr.f32.mxu0 0.0
    %1362 = vmatmul.mubr.f32.gmra.mxu0 %v1230
    %v1363 = vpop.f32.mrf.mxu0
    %v1364 = vadd.f32 %v1197, %v1363
    %v1365 = vpop.f32.mrf.mxu0
    %1366 = vmatprep.mubr.f32.mxu0 0.0
    %1367 = vmatmul.mubr.f32.gmra.mxu0 %v1233
    %v1368 = vpop.f32.mrf.mxu0
    %v1369 = vadd.f32 %v1197, %v1368
    %v1370 = vpop.f32.mrf.mxu0
    %1371 = vmatprep.mubr.f32.mxu0 0.0
    %1372 = vmatmul.mubr.f32.gmra.mxu0 %v1236
    %v1373 = vpop.f32.mrf.mxu0
    %v1374 = vadd.f32 %v1197, %v1373
    %v1375 = vpop.f32.mrf.mxu0
    %1376 = vmatprep.mubr.f32.mxu0 0.0
    %1377 = vmatmul.mubr.f32.gmra.mxu0 %v1239
    %v1378 = vpop.f32.mrf.mxu0
    %v1379 = vadd.f32 %v1197, %v1378
    %v1380 = vpop.f32.mrf.mxu0
    %1381 = vmatprep.mubr.f32.mxu0 0.0
    %1382 = vmatmul.mubr.f32.gmra.mxu0 %v1242
    %v1383 = vpop.f32.mrf.mxu0
    %v1384 = vadd.f32 %v1197, %v1383
    %v1385 = vpop.f32.mrf.mxu0
    %1386 = vmatprep.mubr.f32.mxu0 0.0
    %1387 = vmatmul.mubr.f32.gmra.mxu0 %v1245
    %v1388 = vpop.f32.mrf.mxu0
    %v1389 = vadd.f32 %v1197, %v1388
    %v1390 = vpop.f32.mrf.mxu0
    %1391 = vdwg.mxu0
    %1392 = vmax.xlane.f32.xlu0 %v1314
    %v1393 = vpop.xlane.xlu0 %1392
    %1394 = vmax.xlane.f32.xlu0 %v1319
    %v1395 = vpop.xlane.xlu0 %1394
    %1396 = vmax.xlane.f32.xlu0 %v1324
    %v1397 = vpop.xlane.xlu0 %1396
    %1398 = vmax.xlane.f32.xlu0 %v1329
    %v1399 = vpop.xlane.xlu0 %1398
    %1400 = vmax.xlane.f32.xlu0 %v1334
    %v1401 = vpop.xlane.xlu0 %1400
    %1402 = vmax.xlane.f32.xlu0 %v1339
    %v1403 = vpop.xlane.xlu0 %1402
    %1404 = vmax.xlane.f32.xlu0 %v1344
    %v1405 = vpop.xlane.xlu0 %1404
    %1406 = vmax.xlane.f32.xlu0 %v1349
    %v1407 = vpop.xlane.xlu0 %1406
    %1408 = vmax.xlane.f32.xlu0 %v1354
    %v1409 = vpop.xlane.xlu0 %1408
    %1410 = vmax.xlane.f32.xlu0 %v1359
    %v1411 = vpop.xlane.xlu0 %1410
    %1412 = vmax.xlane.f32.xlu0 %v1364
    %v1413 = vpop.xlane.xlu0 %1412
    %1414 = vmax.xlane.f32.xlu0 %v1369
    %v1415 = vpop.xlane.xlu0 %1414
    %1416 = vmax.xlane.f32.xlu0 %v1374
    %v1417 = vpop.xlane.xlu0 %1416
    %1418 = vmax.xlane.f32.xlu0 %v1379
    %v1419 = vpop.xlane.xlu0 %1418
    %1420 = vmax.xlane.f32.xlu0 %v1384
    %v1421 = vpop.xlane.xlu0 %1420
    %1422 = vmax.xlane.f32.xlu0 %v1389
    %v1423 = vpop.xlane.xlu0 %1422
    %v1424 = vsub.f32 %v1314, %v1393
    %v1425 = vsub.f32 %v1319, %v1395
    %v1426 = vsub.f32 %v1324, %v1397
    %v1427 = vsub.f32 %v1329, %v1399
    %v1428 = vsub.f32 %v1334, %v1401
    %v1429 = vsub.f32 %v1339, %v1403
    %v1430 = vsub.f32 %v1344, %v1405
    %v1431 = vsub.f32 %v1349, %v1407
    %v1432 = vsub.f32 %v1354, %v1409
    %v1433 = vsub.f32 %v1359, %v1411
    %v1434 = vsub.f32 %v1364, %v1413
    %v1435 = vsub.f32 %v1369, %v1415
    %v1436 = vsub.f32 %v1374, %v1417
    %v1437 = vsub.f32 %v1379, %v1419
    %v1438 = vsub.f32 %v1384, %v1421
    %v1439 = vsub.f32 %v1389, %v1423
    %v1440 = vmul.f32 %v1424, 1.442695
    %v1441 = vpow.pop %v1440
    %v1442 = vmul.f32 %v1425, 1.442695
    %v1443 = vpow.pop %v1442
    %v1444 = vmul.f32 %v1426, 1.442695
    %v1445 = vpow.pop %v1444
    %v1446 = vmul.f32 %v1427, 1.442695
    %v1447 = vpow.pop %v1446
    %v1448 = vmul.f32 %v1428, 1.442695
    %v1449 = vpow.pop %v1448
    %v1450 = vmul.f32 %v1429, 1.442695
    %v1451 = vpow.pop %v1450
    %v1452 = vmul.f32 %v1430, 1.442695
    %v1453 = vpow.pop %v1452
    %v1454 = vmul.f32 %v1431, 1.442695
    %v1455 = vpow.pop %v1454
    %v1456 = vmul.f32 %v1432, 1.442695
    %v1457 = vpow.pop %v1456
    %v1458 = vmul.f32 %v1433, 1.442695
    %v1459 = vpow.pop %v1458
    %v1460 = vmul.f32 %v1434, 1.442695
    %v1461 = vpow.pop %v1460
    %v1462 = vmul.f32 %v1435, 1.442695
    %v1463 = vpow.pop %v1462
    %v1464 = vmul.f32 %v1436, 1.442695
    %v1465 = vpow.pop %v1464
    %v1466 = vmul.f32 %v1437, 1.442695
    %v1467 = vpow.pop %v1466
    %v1468 = vmul.f32 %v1438, 1.442695
    %v1469 = vpow.pop %v1468
    %v1470 = vmul.f32 %v1439, 1.442695
    %v1471 = vpow.pop %v1470
    %1472 = vadd.xlane.f32.xlu0 %v1441
    %v1473 = vpop.xlane.xlu0 %1472
    %1474 = vadd.xlane.f32.xlu0 %v1443
    %v1475 = vpop.xlane.xlu0 %1474
    %1476 = vadd.xlane.f32.xlu0 %v1445
    %v1477 = vpop.xlane.xlu0 %1476
    %1478 = vadd.xlane.f32.xlu0 %v1447
    %v1479 = vpop.xlane.xlu0 %1478
    %1480 = vadd.xlane.f32.xlu0 %v1449
    %v1481 = vpop.xlane.xlu0 %1480
    %1482 = vadd.xlane.f32.xlu0 %v1451
    %v1483 = vpop.xlane.xlu0 %1482
    %1484 = vadd.xlane.f32.xlu0 %v1453
    %v1485 = vpop.xlane.xlu0 %1484
    %1486 = vadd.xlane.f32.xlu0 %v1455
    %v1487 = vpop.xlane.xlu0 %1486
    %1488 = vadd.xlane.f32.xlu0 %v1457
    %v1489 = vpop.xlane.xlu0 %1488
    %1490 = vadd.xlane.f32.xlu0 %v1459
    %v1491 = vpop.xlane.xlu0 %1490
    %1492 = vadd.xlane.f32.xlu0 %v1461
    %v1493 = vpop.xlane.xlu0 %1492
    %1494 = vadd.xlane.f32.xlu0 %v1463
    %v1495 = vpop.xlane.xlu0 %1494
    %1496 = vadd.xlane.f32.xlu0 %v1465
    %v1497 = vpop.xlane.xlu0 %1496
    %1498 = vadd.xlane.f32.xlu0 %v1467
    %v1499 = vpop.xlane.xlu0 %1498
    %1500 = vadd.xlane.f32.xlu0 %v1469
    %v1501 = vpop.xlane.xlu0 %1500
    %1502 = vadd.xlane.f32.xlu0 %v1471
    %v1503 = vpop.xlane.xlu0 %1502
    %v1504 = vrcp.pop %v1473
    %v1505 = vmul.f32 %v1441, %v1504
    %v1506 = vrcp.pop %v1475
    %v1507 = vmul.f32 %v1443, %v1506
    %v1508 = vrcp.pop %v1477
    %v1509 = vmul.f32 %v1445, %v1508
    %v1510 = vrcp.pop %v1479
    %v1511 = vmul.f32 %v1447, %v1510
    %v1512 = vrcp.pop %v1481
    %v1513 = vmul.f32 %v1449, %v1512
    %v1514 = vrcp.pop %v1483
    %v1515 = vmul.f32 %v1451, %v1514
    %v1516 = vrcp.pop %v1485
    %v1517 = vmul.f32 %v1453, %v1516
    %v1518 = vrcp.pop %v1487
    %v1519 = vmul.f32 %v1455, %v1518
    %v1520 = vrcp.pop %v1489
    %v1521 = vmul.f32 %v1457, %v1520
    %v1522 = vrcp.pop %v1491
    %v1523 = vmul.f32 %v1459, %v1522
    %v1524 = vrcp.pop %v1493
    %v1525 = vmul.f32 %v1461, %v1524
    %v1526 = vrcp.pop %v1495
    %v1527 = vmul.f32 %v1463, %v1526
    %v1528 = vrcp.pop %v1497
    %v1529 = vmul.f32 %v1465, %v1528
    %v1530 = vrcp.pop %v1499
    %v1531 = vmul.f32 %v1467, %v1530
    %v1532 = vrcp.pop %v1501
    %v1533 = vmul.f32 %v1469, %v1532
    %v1534 = vrcp.pop %v1503
    %v1535 = vmul.f32 %v1471, %v1534
    %1536 = vxpose.xlu0.b32.start [1/16] %v1505, 128
    %1537 = vxpose.xlu0.b32.cont [2/16] %v1507, 128
    %1538 = vxpose.xlu0.b32.cont [3/16] %v1509, 128
    %1539 = vxpose.xlu0.b32.cont [4/16] %v1511, 128
    %1540 = vxpose.xlu0.b32.cont [5/16] %v1513, 128
    %1541 = vxpose.xlu0.b32.cont [6/16] %v1515, 128
    %1542 = vxpose.xlu0.b32.cont [7/16] %v1517, 128
    %1543 = vxpose.xlu0.b32.cont [8/16] %v1519, 128
    %1544 = vxpose.xlu0.b32.cont [9/16] %v1521, 128
    %1545 = vxpose.xlu0.b32.cont [10/16] %v1523, 128
    %1546 = vxpose.xlu0.b32.cont [11/16] %v1525, 128
    %1547 = vxpose.xlu0.b32.cont [12/16] %v1527, 128
    %1548 = vxpose.xlu0.b32.cont [13/16] %v1529, 128
    %1549 = vxpose.xlu0.b32.cont [14/16] %v1531, 128
    %1550 = vxpose.xlu0.b32.cont [15/16] %v1533, 128
    %1551 = vxpose.xlu0.b32.end [16/16] %v1535, 128
    %v1552 = vpop.trf.xlu0
    %v1553 = vpop.trf.xlu0
    %v1554 = vpop.trf.xlu0
    %v1555 = vpop.trf.xlu0
    %v1556 = vpop.trf.xlu0
    %v1557 = vpop.trf.xlu0
    %v1558 = vpop.trf.xlu0
    %v1559 = vpop.trf.xlu0
    %v1560 = vpop.trf.xlu0
    %v1561 = vpop.trf.xlu0
    %v1562 = vpop.trf.xlu0
    %v1563 = vpop.trf.xlu0
    %v1564 = vpop.trf.xlu0
    %v1565 = vpop.trf.xlu0
    %v1566 = vpop.trf.xlu0
    %v1567 = vpop.trf.xlu0
    %1568 = vst [vmem:[#allocation2] sm:$0x3] %v1552
    // Predicated region
    $region54: #{_lambda_.1} parent=1 // pred_check
      _
    $region55: #{_lambda_.1} parent=1 // pred_check_branch
      %1570 = sbr.rel (0) target = $region57
    $region56: #{_lambda_.1} parent=1 // pred_region
      %s1572 = ssub.s32 32, 32
      %1573 = vsyncadd [#allocation3], %s1572
      %s1575 = sshll.u32 [#allocation2], 4
      %s1576 = int_to_ptr.vmem [resolvable:$true] %s1575
      %1578 = dma.vmem_to_hbm [thread:$0]  %s1576, 32, %s13, [#allocation3]
    $region57: #{_lambda_.1} parent=1 // pred_fallthru
      _
    // Predicated region
    $region58: #{_lambda_.1} parent=1 // pred_check
      _
    $region59: #{_lambda_.1} parent=1 // pred_check_branch
      %1580 = sbr.rel (0) target = $region61
    $region60: #{_lambda_.1} parent=1 // pred_region
      %1581 = dma.done [#allocation3], 32
    $region61: #{_lambda_.1} parent=1 // pred_fallthru
      _
    %1582 = vsyncpa [#allocation3], 1

</llo_original>
